<compile_context>
chip_gen: v7x
topology: tpu7x:2x2x1
jax: 0.10.0
libtpu: 0.0.40
codegen_flags: <defaults>
</compile_context>

<pallas_src>
import functools

import jax
import jax.numpy as jnp
from jax.experimental import pallas as pl
from jax.experimental.pallas import tpu as pltpu


def _round_up(n, m):
    return ((n + m - 1) // m) * m


def _pick_tile(n, max_tile):
    """Row tile: multiple of 8, <= max_tile, and >=2 grid steps when possible
    (so both v7x TensorCores get work via the 'parallel' grid axis)."""
    t = min(max_tile, _round_up(pl.cdiv(n, 2), 8))
    return max(t, 8)


def _const_spec(arr):
    """Whole-array BlockSpec whose block index never changes (weight stays resident)."""
    nd = arr.ndim
    return pl.BlockSpec(arr.shape, lambda *_: (0,) * nd)


# ----------------------------------------------------------------------------
# Kernel 1: node encoder + fused src/dst projections (row-tiled).
#   x [TILE_N, 256] bf16 -> relu(x@W0+b0) -> relu(@W1+b1) = h [TILE_N, 32]
#   out = h @ [W_src | W_dst | 0]  ->  [TILE_N, 128] bf16 (lane-dense store)
# ----------------------------------------------------------------------------
def _node_proj_kernel(x_ref, w0_ref, b0_ref, w1_ref, b1_ref, wpq_ref, o_ref):
    x = x_ref[...]                                               # bf16 [TN, 256]
    h = jnp.dot(x, w0_ref[...], preferred_element_type=jnp.float32) + b0_ref[...]
    h = jnp.maximum(h, 0.0).astype(jnp.bfloat16)
    h = jnp.dot(h, w1_ref[...], preferred_element_type=jnp.float32) + b1_ref[...]
    h = jnp.maximum(h, 0.0).astype(jnp.bfloat16)
    pq = jnp.dot(h, wpq_ref[...], preferred_element_type=jnp.float32)
    o_ref[...] = pq.astype(o_ref.dtype)                          # [TN, 128] bf16


def node_projections(x_bf, params, *, max_tile=1024):
    w0, b0, w1, b1, wpq = params
    n, fin = x_bf.shape                                          # fin = 256 (padded)
    d_out = wpq.shape[1]                                         # 128 (padded)
    tile_n = _pick_tile(n, max_tile)
    grid = (pl.cdiv(n, tile_n),)
    flops = 2 * n * (fin * w0.shape[1] + w0.shape[1] * w1.shape[1]
                     + w1.shape[1] * d_out)
    return pl.pallas_call(
        _node_proj_kernel,
        out_shape=jax.ShapeDtypeStruct((n, d_out), jnp.bfloat16),
        grid=grid,
        in_specs=[pl.BlockSpec((tile_n, fin), lambda i: (i, 0)),
                  _const_spec(w0), _const_spec(b0),
                  _const_spec(w1), _const_spec(b1),
                  _const_spec(wpq)],
        out_specs=pl.BlockSpec((tile_n, d_out), lambda i: (i, 0)),
        compiler_params=pltpu.CompilerParams(dimension_semantics=("parallel",)),
        cost_estimate=pl.CostEstimate(
            flops=flops, transcendentals=0,
            bytes_accessed=n * (fin * 2 + d_out * 2)),
    )(x_bf, w0, b0, w1, b1, wpq)


# ----------------------------------------------------------------------------
# Kernel 2: edge encoder + concat-free edge update + grouped classifier
# (group-tiled: one grid row = TILE_G source nodes = TILE_G * topn edges).
# Single packed bf16 input slab per row (lanes): [p | q0 | q1 | ea0 | ea1 | 0].
# ----------------------------------------------------------------------------
def _edge_cls_kernel(topn, dp, fe_pad, slab_ref, w_eenc_ref, w_e_ref, w_e1_ref,
                     wc0_ref, wc1_ref, wc2_ref, wc3_ref, b_ref, o_ref):
    slab = slab_ref[...]                                         # [TG, 128] bf16
    b = b_ref[...]                                               # [8, 128] f32 (packed biases)

    enc_dim = w_eenc_ref.shape[1]                                # 16
    eup_dim = w_e_ref.shape[1]                                   # 32
    eo_dim = w_e1_ref.shape[1]                                   # 16
    b_eenc = b[0:1, :enc_dim]
    b_e0 = b[1:2, :eup_dim]
    b_e1 = b[2:3, :eo_dim]
    bc0 = b[3:4, :wc0_ref.shape[1]]
    bc1 = b[4:5, :wc1_ref.shape[1]]
    bc2 = b[5:6, :wc2_ref.shape[1]]
    bc3 = b[6:7, :wc3_ref.shape[1]]

    p = slab[:, 0:dp].astype(jnp.float32)                        # h[src] @ W_src  [TG, 32]
    ea_off = dp * (1 + topn)

    eo_list = []
    for t in range(topn):                                        # static unroll (topn == 2)
        q = slab[:, dp * (1 + t):dp * (2 + t)].astype(jnp.float32)   # h[dst] @ W_dst
        ea = slab[:, ea_off + fe_pad * t: ea_off + fe_pad * (t + 1)]  # [TG, 8] bf16 (padded)
        e = jnp.dot(ea, w_eenc_ref[...], preferred_element_type=jnp.float32) + b_eenc
        e = jnp.maximum(e, 0.0).astype(jnp.bfloat16)             # edge encoder   [TG, 16]
        # concat-free edge-update layer 0: h[src]@W_src + h[dst]@W_dst + e@W_e + b
        pre = (p + q
               + jnp.dot(e, w_e_ref[...], preferred_element_type=jnp.float32)
               + b_e0)
        h = jnp.maximum(pre, 0.0).astype(jnp.bfloat16)           # [TG, 32]
        eo = jnp.dot(h, w_e1_ref[...], preferred_element_type=jnp.float32) + b_e1
        eo_list.append(jnp.maximum(eo, 0.0).astype(jnp.bfloat16))  # edge embedding [TG, 16]

    # classifier on the per-source concatenation of the topn edge embeddings
    eo_cat = jnp.concatenate(eo_list, axis=-1)                   # [TG, 32] bf16
    c = jnp.maximum(jnp.dot(eo_cat, wc0_ref[...], preferred_element_type=jnp.float32)
                    + bc0, 0.0).astype(jnp.bfloat16)             # [TG, 128]
    c = jnp.maximum(jnp.dot(c, wc1_ref[...], preferred_element_type=jnp.float32)
                    + bc1, 0.0).astype(jnp.bfloat16)             # [TG, 64]
    c = jnp.maximum(jnp.dot(c, wc2_ref[...], preferred_element_type=jnp.float32)
                    + bc2, 0.0).astype(jnp.bfloat16)             # [TG, 32]
    logits = jnp.dot(c, wc3_ref[...], preferred_element_type=jnp.float32) + bc3
    o_ref[...] = logits.astype(o_ref.dtype)                      # lane-dense bf16 [TG, 128]


def edge_and_classify(slab, params, topn, dp, fe_pad, out_pad, *, max_tile=1024):
    w_eenc, w_e, w_e1, wc0, wc1, wc2, wc3, b_pack = params
    n1, slab_w = slab.shape
    tile_g = _pick_tile(n1, max_tile)
    grid = (pl.cdiv(n1, tile_g),)
    per_row = 2 * (topn * (w_eenc.shape[0] * w_eenc.shape[1]
                           + w_e.shape[0] * w_e.shape[1]
                           + w_e1.shape[0] * w_e1.shape[1])
                   + wc0.shape[0] * wc0.shape[1] + wc1.shape[0] * wc1.shape[1]
                   + wc2.shape[0] * wc2.shape[1] + wc3.shape[0] * wc3.shape[1])
    return pl.pallas_call(
        functools.partial(_edge_cls_kernel, topn, dp, fe_pad),
        out_shape=jax.ShapeDtypeStruct((n1, out_pad), jnp.bfloat16),
        grid=grid,
        in_specs=[pl.BlockSpec((tile_g, slab_w), lambda i: (i, 0))]
                 + [_const_spec(a) for a in (w_eenc, w_e, w_e1, wc0, wc1, wc2, wc3, b_pack)],
        out_specs=pl.BlockSpec((tile_g, out_pad), lambda i: (i, 0)),
        compiler_params=pltpu.CompilerParams(dimension_semantics=("parallel",)),
        cost_estimate=pl.CostEstimate(
            flops=n1 * per_row, transcendentals=0,
            bytes_accessed=n1 * (slab_w * 2 + out_pad * 2)),
    )(slab, w_eenc, w_e, w_e1, wc0, wc1, wc2, wc3, b_pack)


# ----------------------------------------------------------------------------
# Model: parameter construction (deterministic synthetic stand-in) + forward.
# ----------------------------------------------------------------------------
class StitchModelPallas:
    """JAX/Pallas re-implementation of StitchModel.forward (eval mode)."""

    def __init__(self, key):
        self.topn = 2                    # StitchModel.topn
        self.node_in = 200 + 9           # run_all_node: 200 interp samples + 9-bin flow hist
        self.node_in_pad = 256           # lane-aligned bf16 feature width
        self.edge_in = 6                 # preprocess edge_attr features
        self.edge_in_pad = 8             # zero-padded per-slot lane stride in the slab
        self.edge_out_dim = 16           # tss_config classifier_feats_dict['edge_out_dim'] (synthetic)
        self.proj_dim = 32               # node embedding dim after encoder
        self.n_cls = self.topn + 1
        self.cls_out_pad = 128           # lane-dense padded logits width
        self.pq_pad = 128                # lane-dense kernel-1 output width
        self.slab_width = 128            # packed kernel-2 input width
        node_hidden = (64, 32)
        edge_enc_dim = 16
        cls_dims = (128, 64, 32, self.n_cls)

        keys = jax.random.split(key, 16)

        def lin(k, fin, fout, scale=0.1):
            kw, kb = jax.random.split(k)
            return (scale * jax.random.normal(kw, (fin, fout), jnp.float32),
                    scale * jax.random.normal(kb, (1, fout), jnp.float32))

        # --- TSS stand-in: node encoder, edge encoder, one edge-update MLP ---
        w_n0, b_n0 = lin(keys[0], self.node_in, node_hidden[0])
        w_n1, b_n1 = lin(keys[1], node_hidden[0], node_hidden[1])
        w_eenc, b_eenc = lin(keys[2], self.edge_in, edge_enc_dim)
        # edge-update layer 0 acts on concat([h[src], h[dst], e]); store it row-split.
        w_src, _ = lin(keys[3], node_hidden[1], 32)
        w_dst, _ = lin(keys[4], node_hidden[1], 32)
        w_e, b_e0 = lin(keys[5], edge_enc_dim, 32)
        w_e1, b_e1 = lin(keys[6], 32, self.edge_out_dim)

        # --- classifier MLP(edge_out_dim*topn, [128,64,32,topn+1], BN, dropout) ---
        cls_in = self.edge_out_dim * self.topn
        dims = (cls_in,) + cls_dims
        cls = [lin(keys[7 + i], dims[i], dims[i + 1]) for i in range(len(cls_dims))]
        # Fold eval-mode BatchNorm1d (gamma=1, beta=0, mean=0, var=1, eps=1e-5) into
        # the hidden layers; dropout is identity in eval.
        # TODO(synk): with trained BN running stats, fold the real per-channel
        # scale/shift here instead of the eval-mode defaults.
        bn_scale = 1.0 / jnp.sqrt(jnp.float32(1.0 + 1e-5))
        cls = [(w * bn_scale, b * bn_scale) if i < len(cls) - 1 else (w, b)
               for i, (w, b) in enumerate(cls)]

        bf = lambda a: a.astype(jnp.bfloat16)

        # kernel-1 params: 256-row-padded encoder L0, encoder L1,
        # fused [W_src | W_dst | 0] projection padded to 128 lanes.
        w_n0_pad = jnp.zeros((self.node_in_pad, node_hidden[0]), jnp.float32)
        w_n0_pad = w_n0_pad.at[:self.node_in].set(w_n0)
        wpq = jnp.zeros((node_hidden[1], self.pq_pad), jnp.float32)
        wpq = wpq.at[:, :32].set(w_src).at[:, 32:64].set(w_dst)
        self.node_params = (bf(w_n0_pad), b_n0, bf(w_n1), b_n1, bf(wpq))

        # kernel-2 params: weights (bf16, resident) + one packed f32 bias slab.
        w_eenc_pad = jnp.zeros((self.edge_in_pad, edge_enc_dim), jnp.float32)
        w_eenc_pad = w_eenc_pad.at[:self.edge_in].set(w_eenc)
        wc0, bc0 = cls[0]                                        # [32, 128]
        wc1, bc1 = cls[1]                                        # [128, 64]
        wc2, bc2 = cls[2]                                        # [64, 32]
        wc3, bc3 = cls[3]                                        # [32, 3]
        wc3_pad = jnp.zeros((dims[-2], self.cls_out_pad), jnp.float32)
        wc3_pad = wc3_pad.at[:, :self.n_cls].set(wc3)
        b_pack = jnp.zeros((8, 128), jnp.float32)
        b_pack = (b_pack.at[0, :edge_enc_dim].set(b_eenc[0])
                        .at[1, :32].set(b_e0[0])
                        .at[2, :self.edge_out_dim].set(b_e1[0])
                        .at[3, :128].set(bc0[0])
                        .at[4, :64].set(bc1[0])
                        .at[5, :32].set(bc2[0])
                        .at[6, :self.n_cls].set(bc3[0]))
        self.edge_cls_params = (bf(w_eenc_pad), bf(w_e), bf(w_e1),
                                bf(wc0), bf(wc1), bf(wc2), bf(wc3_pad), b_pack)

    def forward(self, x, edge_index, edge_attr):
        topn, dp, fe, fe_pad = self.topn, self.proj_dim, self.edge_in, self.edge_in_pad
        dst = edge_index[1]
        n1 = edge_index.shape[1] // topn

        # bf16 + 256-lane-aligned node features (halves kernel-1's dominant HBM
        # stream; free if upstream preprocessing emits bf16 directly).
        x_bf = jnp.pad(x.astype(jnp.bfloat16),
                       ((0, 0), (0, self.node_in_pad - x.shape[1])))
        pq = node_projections(x_bf, self.node_params)            # [N, 128] bf16: [p | q | 0]

        # preprocess() emits the edge list source-sorted with exactly `topn`
        # consecutive edges per slice-1 node (sources 0..N1-1), so the
        # unique()/argsort grouping of the original is a static per-slot split.
        # TODO(synk): if a node may have != topn edges, a segment-based grouping
        # is required instead of this static split.
        p1 = pq[:n1, 0:dp]                                       # h[src] @ W_src
        dst_mat = dst.reshape(n1, topn)
        ea = edge_attr.reshape(n1, topn, fe).astype(jnp.bfloat16)
        # TODO(synk): on v7x, fuse this gather into kernel 2 via
        # PrefetchScalarGridSpec + manual row-gather DMA to skip the pq HBM
        # round-trip (the packed-slab approach below captures most of the win
        # on v5e/v6e).
        chunks = [p1] + [pq[dst_mat[:, t], dp:2 * dp] for t in range(topn)]
        chunks += [jnp.pad(ea[:, t, :], ((0, 0), (0, fe_pad - fe)))
                   for t in range(topn)]
        used = dp * (1 + topn) + fe_pad * topn
        chunks.append(jnp.zeros((n1, self.slab_width - used), jnp.bfloat16))
        slab = jnp.concatenate(chunks, axis=1)                   # [N1, 128] bf16

        logits_pad = edge_and_classify(slab, self.edge_cls_params, topn, dp,
                                       fe_pad, self.cls_out_pad)
        return logits_pad[:, :self.n_cls].astype(jnp.float32)    # [N1, topn + 1]


# ----------------------------------------------------------------------------
# Demo / smoke test.
# ----------------------------------------------------------------------------
if __name__ == "__main__":
    key = jax.random.PRNGKey(0)
    k_model, k_x, k_attr, k_nbr = jax.random.split(key, 4)

    model = StitchModelPallas(k_model)

    N1, N2 = 8, 8                                    # nuclei instances per slice
    x = jax.random.normal(k_x, (N1 + N2, model.node_in), jnp.float32)

    # edge graph: each source node i (slice 1) connects to topn candidates in slice 2
    nbr = jax.random.randint(k_nbr, (N1, model.topn), 0, N2)
    src = jnp.repeat(jnp.arange(N1), model.topn)
    dst = N1 + nbr.reshape(-1)
    edge_index = jnp.stack([src, dst]).astype(jnp.int32)         # [2, N1*topn]
    edge_attr = jax.random.normal(k_attr, (N1 * model.topn, model.edge_in), jnp.float32)

    out = jax.jit(model.forward)(x, edge_index, edge_attr)
    out = jax.block_until_ready(out)
    assert out.shape == (N1, model.topn + 1), out.shape
    assert out.dtype == jnp.float32
    print("KERNEL_OK")
</pallas_src>

<mosaic_0001>
module attributes {stable_mosaic.version = 11 : i64} {
  func.func @_node_proj_kernel(%arg0: i32, %arg1: memref<8x256xbf16, #tpu.memory_space<vmem>>, %arg2: memref<256x64xbf16, #tpu.memory_space<vmem>>, %arg3: memref<1x64xf32, #tpu.memory_space<vmem>>, %arg4: memref<64x32xbf16, #tpu.memory_space<vmem>>, %arg5: memref<1x32xf32, #tpu.memory_space<vmem>>, %arg6: memref<32x128xbf16, #tpu.memory_space<vmem>>, %arg7: memref<8x128xbf16, #tpu.memory_space<vmem>>) attributes {dimension_semantics = [#tpu.dimension_semantics<parallel>], iteration_bounds = array<i64: 2>, scalar_prefetch = 0 : i64, scratch_operands = 0 : i64, tpu.core_type = #tpu.core_type<tc>, window_params = [{transform_indices = @transform_0, window_bounds = array<i64: 8, 256>}, {pipeline_mode = #tpu.pipeline_mode<synchronous>, transform_indices = @transform_1, window_bounds = array<i64: 256, 64>}, {pipeline_mode = #tpu.pipeline_mode<synchronous>, transform_indices = @transform_2, window_bounds = array<i64: 1, 64>}, {pipeline_mode = #tpu.pipeline_mode<synchronous>, transform_indices = @transform_3, window_bounds = array<i64: 64, 32>}, {pipeline_mode = #tpu.pipeline_mode<synchronous>, transform_indices = @transform_4, window_bounds = array<i64: 1, 32>}, {pipeline_mode = #tpu.pipeline_mode<synchronous>, transform_indices = @transform_5, window_bounds = array<i64: 32, 128>}, {transform_indices = @transform_6, window_bounds = array<i64: 8, 128>}]} {
    %c0 = arith.constant 0 : index
    %c0_0 = arith.constant 0 : index
    %0 = vector.load %arg1[%c0, %c0_0] : memref<8x256xbf16, #tpu.memory_space<vmem>>, vector<8x256xbf16>
    %c0_1 = arith.constant 0 : index
    %c0_2 = arith.constant 0 : index
    %1 = vector.load %arg2[%c0_1, %c0_2] : memref<256x64xbf16, #tpu.memory_space<vmem>>, vector<256x64xbf16>
    %cst = arith.constant dense<0.000000e+00> : vector<8x64xf32>
    %2 = tpu.matmul %0, %1, %cst {dimension_numbers = #tpu.dot_dimension_numbers<[1], [0], [0], [1], [0, 0, 1, 1], [], []>} : vector<8x256xbf16>, vector<256x64xbf16>, vector<8x64xf32> -> vector<8x64xf32>
    %c0_3 = arith.constant 0 : index
    %c0_4 = arith.constant 0 : index
    %3 = vector.load %arg3[%c0_3, %c0_4] : memref<1x64xf32, #tpu.memory_space<vmem>>, vector<1x64xf32>
    %4 = vector.broadcast %3 : vector<1x64xf32> to vector<8x64xf32>
    %5 = arith.addf %2, %4 : vector<8x64xf32>
    %cst_5 = arith.constant 0.000000e+00 : f32
    %6 = vector.broadcast %cst_5 : f32 to vector<8x64xf32>
    %7 = arith.maximumf %5, %6 : vector<8x64xf32>
    %8 = arith.truncf %7 : vector<8x64xf32> to vector<8x64xbf16>
    %c0_6 = arith.constant 0 : index
    %c0_7 = arith.constant 0 : index
    %9 = vector.load %arg4[%c0_6, %c0_7] : memref<64x32xbf16, #tpu.memory_space<vmem>>, vector<64x32xbf16>
    %cst_8 = arith.constant dense<0.000000e+00> : vector<8x32xf32>
    %10 = tpu.matmul %8, %9, %cst_8 {dimension_numbers = #tpu.dot_dimension_numbers<[1], [0], [0], [1], [0, 0, 1, 1], [], []>} : vector<8x64xbf16>, vector<64x32xbf16>, vector<8x32xf32> -> vector<8x32xf32>
    %c0_9 = arith.constant 0 : index
    %c0_10 = arith.constant 0 : index
    %11 = vector.load %arg5[%c0_9, %c0_10] : memref<1x32xf32, #tpu.memory_space<vmem>>, vector<1x32xf32>
    %12 = vector.broadcast %11 : vector<1x32xf32> to vector<8x32xf32>
    %13 = arith.addf %10, %12 : vector<8x32xf32>
    %cst_11 = arith.constant 0.000000e+00 : f32
    %14 = vector.broadcast %cst_11 : f32 to vector<8x32xf32>
    %15 = arith.maximumf %13, %14 : vector<8x32xf32>
    %16 = arith.truncf %15 : vector<8x32xf32> to vector<8x32xbf16>
    %c0_12 = arith.constant 0 : index
    %c0_13 = arith.constant 0 : index
    %17 = vector.load %arg6[%c0_12, %c0_13] : memref<32x128xbf16, #tpu.memory_space<vmem>>, vector<32x128xbf16>
    %cst_14 = arith.constant dense<0.000000e+00> : vector<8x128xf32>
    %18 = tpu.matmul %16, %17, %cst_14 {dimension_numbers = #tpu.dot_dimension_numbers<[1], [0], [0], [1], [0, 0, 1, 1], [], []>} : vector<8x32xbf16>, vector<32x128xbf16>, vector<8x128xf32> -> vector<8x128xf32>
    %19 = arith.truncf %18 : vector<8x128xf32> to vector<8x128xbf16>
    %c0_15 = arith.constant 0 : index
    %c0_16 = arith.constant 0 : index
    %20 = vector.load %arg7[%c0_15, %c0_16] : memref<8x128xbf16, #tpu.memory_space<vmem>>, vector<8x128xbf16>
    tpu.vector_store %arg7[%c0_15, %c0_16], %19 {strides = array<i32>} : memref<8x128xbf16, #tpu.memory_space<vmem>>, vector<8x128xbf16>,
    return
  }
  func.func @transform_0(%arg0: i32) -> (i32, i32) {
    %c0_i32 = arith.constant 0 : i32
    %c0_i32_0 = arith.constant 0 : i32
    return %arg0, %c0_i32 : i32, i32
  }
  func.func @transform_1(%arg0: i32) -> (i32, i32) {
    %c0_i32 = arith.constant 0 : i32
    %c0_i32_0 = arith.constant 0 : i32
    %c0_i32_1 = arith.constant 0 : i32
    return %c0_i32, %c0_i32_0 : i32, i32
  }
  func.func @transform_2(%arg0: i32) -> (i32, i32) {
    %c0_i32 = arith.constant 0 : i32
    %c0_i32_0 = arith.constant 0 : i32
    %c0_i32_1 = arith.constant 0 : i32
    return %c0_i32, %c0_i32_0 : i32, i32
  }
  func.func @transform_3(%arg0: i32) -> (i32, i32) {
    %c0_i32 = arith.constant 0 : i32
    %c0_i32_0 = arith.constant 0 : i32
    %c0_i32_1 = arith.constant 0 : i32
    return %c0_i32, %c0_i32_0 : i32, i32
  }
  func.func @transform_4(%arg0: i32) -> (i32, i32) {
    %c0_i32 = arith.constant 0 : i32
    %c0_i32_0 = arith.constant 0 : i32
    %c0_i32_1 = arith.constant 0 : i32
    return %c0_i32, %c0_i32_0 : i32, i32
  }
  func.func @transform_5(%arg0: i32) -> (i32, i32) {
    %c0_i32 = arith.constant 0 : i32
    %c0_i32_0 = arith.constant 0 : i32
    %c0_i32_1 = arith.constant 0 : i32
    return %c0_i32, %c0_i32_0 : i32, i32
  }
  func.func @transform_6(%arg0: i32) -> (i32, i32) {
    %c0_i32 = arith.constant 0 : i32
    %c0_i32_0 = arith.constant 0 : i32
    return %arg0, %c0_i32 : i32, i32
  }
}

module attributes {stable_mosaic.version = 11 : i64} {
  func.func @_edge_cls_kernel(%arg0: i32, %arg1: memref<8x128xbf16, #tpu.memory_space<vmem>>, %arg2: memref<8x16xbf16, #tpu.memory_space<vmem>>, %arg3: memref<16x32xbf16, #tpu.memory_space<vmem>>, %arg4: memref<32x16xbf16, #tpu.memory_space<vmem>>, %arg5: memref<32x128xbf16, #tpu.memory_space<vmem>>, %arg6: memref<128x64xbf16, #tpu.memory_space<vmem>>, %arg7: memref<64x32xbf16, #tpu.memory_space<vmem>>, %arg8: memref<32x128xbf16, #tpu.memory_space<vmem>>, %arg9: memref<8x128xf32, #tpu.memory_space<vmem>>, %arg10: memref<8x128xbf16, #tpu.memory_space<vmem>>) attributes {dimension_semantics = [#tpu.dimension_semantics<parallel>], iteration_bounds = array<i64: 1>, scalar_prefetch = 0 : i64, scratch_operands = 0 : i64, tpu.core_type = #tpu.core_type<tc>, window_params = [{transform_indices = @transform_0, window_bounds = array<i64: 8, 128>}, {pipeline_mode = #tpu.pipeline_mode<synchronous>, transform_indices = @transform_1, window_bounds = array<i64: 8, 16>}, {pipeline_mode = #tpu.pipeline_mode<synchronous>, transform_indices = @transform_2, window_bounds = array<i64: 16, 32>}, {pipeline_mode = #tpu.pipeline_mode<synchronous>, transform_indices = @transform_3, window_bounds = array<i64: 32, 16>}, {pipeline_mode = #tpu.pipeline_mode<synchronous>, transform_indices = @transform_4, window_bounds = array<i64: 32, 128>}, {pipeline_mode = #tpu.pipeline_mode<synchronous>, transform_indices = @transform_5, window_bounds = array<i64: 128, 64>}, {pipeline_mode = #tpu.pipeline_mode<synchronous>, transform_indices = @transform_6, window_bounds = array<i64: 64, 32>}, {pipeline_mode = #tpu.pipeline_mode<synchronous>, transform_indices = @transform_7, window_bounds = array<i64: 32, 128>}, {pipeline_mode = #tpu.pipeline_mode<synchronous>, transform_indices = @transform_8, window_bounds = array<i64: 8, 128>}, {transform_indices = @transform_9, window_bounds = array<i64: 8, 128>}]} {
    %c0 = arith.constant 0 : index
    %c0_0 = arith.constant 0 : index
    %0 = vector.load %arg1[%c0, %c0_0] : memref<8x128xbf16, #tpu.memory_space<vmem>>, vector<8x128xbf16>
    %c0_1 = arith.constant 0 : index
    %c0_2 = arith.constant 0 : index
    %1 = vector.load %arg9[%c0_1, %c0_2] : memref<8x128xf32, #tpu.memory_space<vmem>>, vector<8x128xf32>
    %2 = vector.extract_strided_slice %1 {offsets = [0, 0], sizes = [1, 16], strides = [1, 1]} : vector<8x128xf32> to vector<1x16xf32>
    %3 = vector.extract_strided_slice %1 {offsets = [1, 0], sizes = [1, 32], strides = [1, 1]} : vector<8x128xf32> to vector<1x32xf32>
    %4 = vector.extract_strided_slice %1 {offsets = [2, 0], sizes = [1, 16], strides = [1, 1]} : vector<8x128xf32> to vector<1x16xf32>
    %5 = vector.extract_strided_slice %1 {offsets = [3, 0], sizes = [1, 128], strides = [1, 1]} : vector<8x128xf32> to vector<1x128xf32>
    %6 = vector.extract_strided_slice %1 {offsets = [4, 0], sizes = [1, 64], strides = [1, 1]} : vector<8x128xf32> to vector<1x64xf32>
    %7 = vector.extract_strided_slice %1 {offsets = [5, 0], sizes = [1, 32], strides = [1, 1]} : vector<8x128xf32> to vector<1x32xf32>
    %8 = vector.extract_strided_slice %1 {offsets = [6, 0], sizes = [1, 128], strides = [1, 1]} : vector<8x128xf32> to vector<1x128xf32>
    %9 = vector.extract_strided_slice %0 {offsets = [0, 0], sizes = [8, 32], strides = [1, 1]} : vector<8x128xbf16> to vector<8x32xbf16>
    %10 = arith.extf %9 : vector<8x32xbf16> to vector<8x32xf32>
    %11 = vector.extract_strided_slice %0 {offsets = [0, 32], sizes = [8, 32], strides = [1, 1]} : vector<8x128xbf16> to vector<8x32xbf16>
    %12 = arith.extf %11 : vector<8x32xbf16> to vector<8x32xf32>
    %13 = vector.extract_strided_slice %0 {offsets = [0, 96], sizes = [8, 8], strides = [1, 1]} : vector<8x128xbf16> to vector<8x8xbf16>
    %c0_3 = arith.constant 0 : index
    %c0_4 = arith.constant 0 : index
    %14 = vector.load %arg2[%c0_3, %c0_4] : memref<8x16xbf16, #tpu.memory_space<vmem>>, vector<8x16xbf16>
    %cst = arith.constant dense<0.000000e+00> : vector<8x16xf32>
    %15 = tpu.matmul %13, %14, %cst {dimension_numbers = #tpu.dot_dimension_numbers<[1], [0], [0], [1], [0, 0, 1, 1], [], []>} : vector<8x8xbf16>, vector<8x16xbf16>, vector<8x16xf32> -> vector<8x16xf32>
    %16 = vector.broadcast %2 : vector<1x16xf32> to vector<8x16xf32>
    %17 = arith.addf %15, %16 : vector<8x16xf32>
    %cst_5 = arith.constant 0.000000e+00 : f32
    %18 = vector.broadcast %cst_5 : f32 to vector<8x16xf32>
    %19 = arith.maximumf %17, %18 : vector<8x16xf32>
    %20 = arith.truncf %19 : vector<8x16xf32> to vector<8x16xbf16>
    %21 = arith.addf %10, %12 : vector<8x32xf32>
    %c0_6 = arith.constant 0 : index
    %c0_7 = arith.constant 0 : index
    %22 = vector.load %arg3[%c0_6, %c0_7] : memref<16x32xbf16, #tpu.memory_space<vmem>>, vector<16x32xbf16>
    %cst_8 = arith.constant dense<0.000000e+00> : vector<8x32xf32>
    %23 = tpu.matmul %20, %22, %cst_8 {dimension_numbers = #tpu.dot_dimension_numbers<[1], [0], [0], [1], [0, 0, 1, 1], [], []>} : vector<8x16xbf16>, vector<16x32xbf16>, vector<8x32xf32> -> vector<8x32xf32>
    %24 = arith.addf %21, %23 : vector<8x32xf32>
    %25 = vector.broadcast %3 : vector<1x32xf32> to vector<8x32xf32>
    %26 = arith.addf %24, %25 : vector<8x32xf32>
    %cst_9 = arith.constant 0.000000e+00 : f32
    %27 = vector.broadcast %cst_9 : f32 to vector<8x32xf32>
    %28 = arith.maximumf %26, %27 : vector<8x32xf32>
    %29 = arith.truncf %28 : vector<8x32xf32> to vector<8x32xbf16>
    %c0_10 = arith.constant 0 : index
    %c0_11 = arith.constant 0 : index
    %30 = vector.load %arg4[%c0_10, %c0_11] : memref<32x16xbf16, #tpu.memory_space<vmem>>, vector<32x16xbf16>
    %cst_12 = arith.constant dense<0.000000e+00> : vector<8x16xf32>
    %31 = tpu.matmul %29, %30, %cst_12 {dimension_numbers = #tpu.dot_dimension_numbers<[1], [0], [0], [1], [0, 0, 1, 1], [], []>} : vector<8x32xbf16>, vector<32x16xbf16>, vector<8x16xf32> -> vector<8x16xf32>
    %32 = vector.broadcast %4 : vector<1x16xf32> to vector<8x16xf32>
    %33 = arith.addf %31, %32 : vector<8x16xf32>
    %cst_13 = arith.constant 0.000000e+00 : f32
    %34 = vector.broadcast %cst_13 : f32 to vector<8x16xf32>
    %35 = arith.maximumf %33, %34 : vector<8x16xf32>
    %36 = arith.truncf %35 : vector<8x16xf32> to vector<8x16xbf16>
    %37 = vector.extract_strided_slice %0 {offsets = [0, 64], sizes = [8, 32], strides = [1, 1]} : vector<8x128xbf16> to vector<8x32xbf16>
    %38 = arith.extf %37 : vector<8x32xbf16> to vector<8x32xf32>
    %39 = vector.extract_strided_slice %0 {offsets = [0, 104], sizes = [8, 8], strides = [1, 1]} : vector<8x128xbf16> to vector<8x8xbf16>
    %c0_14 = arith.constant 0 : index
    %c0_15 = arith.constant 0 : index
    %40 = vector.load %arg2[%c0_14, %c0_15] : memref<8x16xbf16, #tpu.memory_space<vmem>>, vector<8x16xbf16>
    %cst_16 = arith.constant dense<0.000000e+00> : vector<8x16xf32>
    %41 = tpu.matmul %39, %40, %cst_16 {dimension_numbers = #tpu.dot_dimension_numbers<[1], [0], [0], [1], [0, 0, 1, 1], [], []>} : vector<8x8xbf16>, vector<8x16xbf16>, vector<8x16xf32> -> vector<8x16xf32>
    %42 = vector.broadcast %2 : vector<1x16xf32> to vector<8x16xf32>
    %43 = arith.addf %41, %42 : vector<8x16xf32>
    %cst_17 = arith.constant 0.000000e+00 : f32
    %44 = vector.broadcast %cst_17 : f32 to vector<8x16xf32>
    %45 = arith.maximumf %43, %44 : vector<8x16xf32>
    %46 = arith.truncf %45 : vector<8x16xf32> to vector<8x16xbf16>
    %47 = arith.addf %10, %38 : vector<8x32xf32>
    %c0_18 = arith.constant 0 : index
    %c0_19 = arith.constant 0 : index
    %48 = vector.load %arg3[%c0_18, %c0_19] : memref<16x32xbf16, #tpu.memory_space<vmem>>, vector<16x32xbf16>
    %cst_20 = arith.constant dense<0.000000e+00> : vector<8x32xf32>
    %49 = tpu.matmul %46, %48, %cst_20 {dimension_numbers = #tpu.dot_dimension_numbers<[1], [0], [0], [1], [0, 0, 1, 1], [], []>} : vector<8x16xbf16>, vector<16x32xbf16>, vector<8x32xf32> -> vector<8x32xf32>
    %50 = arith.addf %47, %49 : vector<8x32xf32>
    %51 = vector.broadcast %3 : vector<1x32xf32> to vector<8x32xf32>
    %52 = arith.addf %50, %51 : vector<8x32xf32>
    %cst_21 = arith.constant 0.000000e+00 : f32
    %53 = vector.broadcast %cst_21 : f32 to vector<8x32xf32>
    %54 = arith.maximumf %52, %53 : vector<8x32xf32>
    %55 = arith.truncf %54 : vector<8x32xf32> to vector<8x32xbf16>
    %c0_22 = arith.constant 0 : index
    %c0_23 = arith.constant 0 : index
    %56 = vector.load %arg4[%c0_22, %c0_23] : memref<32x16xbf16, #tpu.memory_space<vmem>>, vector<32x16xbf16>
    %cst_24 = arith.constant dense<0.000000e+00> : vector<8x16xf32>
    %57 = tpu.matmul %55, %56, %cst_24 {dimension_numbers = #tpu.dot_dimension_numbers<[1], [0], [0], [1], [0, 0, 1, 1], [], []>} : vector<8x32xbf16>, vector<32x16xbf16>, vector<8x16xf32> -> vector<8x16xf32>
    %58 = vector.broadcast %4 : vector<1x16xf32> to vector<8x16xf32>
    %59 = arith.addf %57, %58 : vector<8x16xf32>
    %cst_25 = arith.constant 0.000000e+00 : f32
    %60 = vector.broadcast %cst_25 : f32 to vector<8x16xf32>
    %61 = arith.maximumf %59, %60 : vector<8x16xf32>
    %62 = arith.truncf %61 : vector<8x16xf32> to vector<8x16xbf16>
    %63 = tpu.concatenate %36, %62 in 1 : vector<8x16xbf16>, vector<8x16xbf16> -> vector<8x32xbf16>
    %c0_26 = arith.constant 0 : index
    %c0_27 = arith.constant 0 : index
    %64 = vector.load %arg5[%c0_26, %c0_27] : memref<32x128xbf16, #tpu.memory_space<vmem>>, vector<32x128xbf16>
    %cst_28 = arith.constant dense<0.000000e+00> : vector<8x128xf32>
    %65 = tpu.matmul %63, %64, %cst_28 {dimension_numbers = #tpu.dot_dimension_numbers<[1], [0], [0], [1], [0, 0, 1, 1], [], []>} : vector<8x32xbf16>, vector<32x128xbf16>, vector<8x128xf32> -> vector<8x128xf32>
    %66 = vector.broadcast %5 : vector<1x128xf32> to vector<8x128xf32>
    %67 = arith.addf %65, %66 : vector<8x128xf32>
    %cst_29 = arith.constant 0.000000e+00 : f32
    %68 = vector.broadcast %cst_29 : f32 to vector<8x128xf32>
    %69 = arith.maximumf %67, %68 : vector<8x128xf32>
    %70 = arith.truncf %69 : vector<8x128xf32> to vector<8x128xbf16>
    %c0_30 = arith.constant 0 : index
    %c0_31 = arith.constant 0 : index
    %71 = vector.load %arg6[%c0_30, %c0_31] : memref<128x64xbf16, #tpu.memory_space<vmem>>, vector<128x64xbf16>
    %cst_32 = arith.constant dense<0.000000e+00> : vector<8x64xf32>
    %72 = tpu.matmul %70, %71, %cst_32 {dimension_numbers = #tpu.dot_dimension_numbers<[1], [0], [0], [1], [0, 0, 1, 1], [], []>} : vector<8x128xbf16>, vector<128x64xbf16>, vector<8x64xf32> -> vector<8x64xf32>
    %73 = vector.broadcast %6 : vector<1x64xf32> to vector<8x64xf32>
    %74 = arith.addf %72, %73 : vector<8x64xf32>
    %cst_33 = arith.constant 0.000000e+00 : f32
    %75 = vector.broadcast %cst_33 : f32 to vector<8x64xf32>
    %76 = arith.maximumf %74, %75 : vector<8x64xf32>
    %77 = arith.truncf %76 : vector<8x64xf32> to vector<8x64xbf16>
    %c0_34 = arith.constant 0 : index
    %c0_35 = arith.constant 0 : index
    %78 = vector.load %arg7[%c0_34, %c0_35] : memref<64x32xbf16, #tpu.memory_space<vmem>>, vector<64x32xbf16>
    %cst_36 = arith.constant dense<0.000000e+00> : vector<8x32xf32>
    %79 = tpu.matmul %77, %78, %cst_36 {dimension_numbers = #tpu.dot_dimension_numbers<[1], [0], [0], [1], [0, 0, 1, 1], [], []>} : vector<8x64xbf16>, vector<64x32xbf16>, vector<8x32xf32> -> vector<8x32xf32>
    %80 = vector.broadcast %7 : vector<1x32xf32> to vector<8x32xf32>
    %81 = arith.addf %79, %80 : vector<8x32xf32>
    %cst_37 = arith.constant 0.000000e+00 : f32
    %82 = vector.broadcast %cst_37 : f32 to vector<8x32xf32>
    %83 = arith.maximumf %81, %82 : vector<8x32xf32>
    %84 = arith.truncf %83 : vector<8x32xf32> to vector<8x32xbf16>
    %c0_38 = arith.constant 0 : index
    %c0_39 = arith.constant 0 : index
    %85 = vector.load %arg8[%c0_38, %c0_39] : memref<32x128xbf16, #tpu.memory_space<vmem>>, vector<32x128xbf16>
    %cst_40 = arith.constant dense<0.000000e+00> : vector<8x128xf32>
    %86 = tpu.matmul %84, %85, %cst_40 {dimension_numbers = #tpu.dot_dimension_numbers<[1], [0], [0], [1], [0, 0, 1, 1], [], []>} : vector<8x32xbf16>, vector<32x128xbf16>, vector<8x128xf32> -> vector<8x128xf32>
    %87 = vector.broadcast %8 : vector<1x128xf32> to vector<8x128xf32>
    %88 = arith.addf %86, %87 : vector<8x128xf32>
    %89 = arith.truncf %88 : vector<8x128xf32> to vector<8x128xbf16>
    %c0_41 = arith.constant 0 : index
    %c0_42 = arith.constant 0 : index
    %90 = vector.load %arg10[%c0_41, %c0_42] : memref<8x128xbf16, #tpu.memory_space<vmem>>, vector<8x128xbf16>
    tpu.vector_store %arg10[%c0_41, %c0_42], %89 {strides = array<i32>} : memref<8x128xbf16, #tpu.memory_space<vmem>>, vector<8x128xbf16>,
    return
  }
  func.func @transform_0(%arg0: i32) -> (i32, i32) {
    %c0_i32 = arith.constant 0 : i32
    %c0_i32_0 = arith.constant 0 : i32
    return %arg0, %c0_i32 : i32, i32
  }
  func.func @transform_1(%arg0: i32) -> (i32, i32) {
    %c0_i32 = arith.constant 0 : i32
    %c0_i32_0 = arith.constant 0 : i32
    %c0_i32_1 = arith.constant 0 : i32
    return %c0_i32, %c0_i32_0 : i32, i32
  }
  func.func @transform_2(%arg0: i32) -> (i32, i32) {
    %c0_i32 = arith.constant 0 : i32
    %c0_i32_0 = arith.constant 0 : i32
    %c0_i32_1 = arith.constant 0 : i32
    return %c0_i32, %c0_i32_0 : i32, i32
  }
  func.func @transform_3(%arg0: i32) -> (i32, i32) {
    %c0_i32 = arith.constant 0 : i32
    %c0_i32_0 = arith.constant 0 : i32
    %c0_i32_1 = arith.constant 0 : i32
    return %c0_i32, %c0_i32_0 : i32, i32
  }
  func.func @transform_4(%arg0: i32) -> (i32, i32) {
    %c0_i32 = arith.constant 0 : i32
    %c0_i32_0 = arith.constant 0 : i32
    %c0_i32_1 = arith.constant 0 : i32
    return %c0_i32, %c0_i32_0 : i32, i32
  }
  func.func @transform_5(%arg0: i32) -> (i32, i32) {
    %c0_i32 = arith.constant 0 : i32
    %c0_i32_0 = arith.constant 0 : i32
    %c0_i32_1 = arith.constant 0 : i32
    return %c0_i32, %c0_i32_0 : i32, i32
  }
  func.func @transform_6(%arg0: i32) -> (i32, i32) {
    %c0_i32 = arith.constant 0 : i32
    %c0_i32_0 = arith.constant 0 : i32
    %c0_i32_1 = arith.constant 0 : i32
    return %c0_i32, %c0_i32_0 : i32, i32
  }
  func.func @transform_7(%arg0: i32) -> (i32, i32) {
    %c0_i32 = arith.constant 0 : i32
    %c0_i32_0 = arith.constant 0 : i32
    %c0_i32_1 = arith.constant 0 : i32
    return %c0_i32, %c0_i32_0 : i32, i32
  }
  func.func @transform_8(%arg0: i32) -> (i32, i32) {
    %c0_i32 = arith.constant 0 : i32
    %c0_i32_0 = arith.constant 0 : i32
    %c0_i32_1 = arith.constant 0 : i32
    return %c0_i32, %c0_i32_0 : i32, i32
  }
  func.func @transform_9(%arg0: i32) -> (i32, i32) {
    %c0_i32 = arith.constant 0 : i32
    %c0_i32_0 = arith.constant 0 : i32
    return %arg0, %c0_i32 : i32, i32
  }
}

</mosaic_0001>

<llo_original>
// kernel: squeeze.5
$region0: #{squeeze.5}
  %s0 = inlined_call_operand.vmem [shape: s32[16], index: 0, kind: input, shape index: {}]
  %s1 = inlined_call_operand.vmem [shape: s32[8,2], index: 1, kind: output, shape index: {}]
  $region1: #{squeeze.5} parent=0
    #allocation0 [shape = 'u8[4096]{0}', space=vmem, size = 0x1000, scoped, tag = 'scoped mem for input reshape']
    %s3 = sshllo.u32 0, 1
    %v4 = vld [vmem:[%s0] sm:%s3]
    %5 = vst [vmem:[#allocation0] sm:%s3] %v4
    %v6 = vld [vmem:[#allocation0] sm:$0x1]
    %vm7 = vcmask 15360
    %8 = vst.msk [vmem:[%s1] sm:$0x1] %vm7, %v6
    %v9 = vld [vmem:[#allocation0] sm:$0x1]
    %10 = vrot.lane.b32.xlu0 %v9, 126
    %v11 = vpop.permute.xlu0 %10
    %vm12 = vcmask 15360
    %s13 = scalar_lea.vmem %s1, 1
    %14 = vst.msk [vmem:[%s13] sm:$0x1] %vm12, %v11
    %v15 = vld [vmem:[#allocation0] sm:$0x1]
    %16 = vrot.lane.b32.xlu0 %v15, 124
    %v17 = vpop.permute.xlu0 %16
    %vm18 = vcmask 15360
    %s19 = scalar_lea.vmem %s1, 2
    %20 = vst.msk [vmem:[%s19] sm:$0x1] %vm18, %v17
    %v21 = vld [vmem:[#allocation0] sm:$0x1]
    %22 = vrot.lane.b32.xlu0 %v21, 122
    %v23 = vpop.permute.xlu0 %22
    %vm24 = vcmask 15360
    %s25 = scalar_lea.vmem %s1, 3
    %26 = vst.msk [vmem:[%s25] sm:$0x1] %vm24, %v23
    %v27 = vld [vmem:[#allocation0] sm:$0x1]
    %28 = vrot.lane.b32.xlu0 %v27, 120
    %v29 = vpop.permute.xlu0 %28
    %vm30 = vcmask 15360
    %s31 = scalar_lea.vmem %s1, 4
    %32 = vst.msk [vmem:[%s31] sm:$0x1] %vm30, %v29
    %v33 = vld [vmem:[#allocation0] sm:$0x1]
    %34 = vrot.lane.b32.xlu0 %v33, 118
    %v35 = vpop.permute.xlu0 %34
    %vm36 = vcmask 15360
    %s37 = scalar_lea.vmem %s1, 5
    %38 = vst.msk [vmem:[%s37] sm:$0x1] %vm36, %v35
    %v39 = vld [vmem:[#allocation0] sm:$0x1]
    %40 = vrot.lane.b32.xlu0 %v39, 116
    %v41 = vpop.permute.xlu0 %40
    %vm42 = vcmask 15360
    %s43 = scalar_lea.vmem %s1, 6
    %44 = vst.msk [vmem:[%s43] sm:$0x1] %vm42, %v41
    %v45 = vld [vmem:[#allocation0] sm:$0x1]
    %46 = vrot.lane.b32.xlu0 %v45, 114
    %v47 = vpop.permute.xlu0 %46
    %vm48 = vcmask 15360
    %s49 = scalar_lea.vmem %s1, 7
    %50 = vst.msk [vmem:[%s49] sm:$0x1] %vm48, %v47

// kernel: forward.2
$region0: #{forward.2}
  #allocation0 [shape = 'u32[]', space=smem, size = 0x4, offset = 0x4, fixed_abs, tag = 'smem constant byte address 0x4 - core index']
  #allocation1 [shape = 'u32[144,128]{1,0:T(1,128)}', space=vmem, size = 0x12000, scoped, tag = 'internal scratch']
  %s0 = inlined_call_operand.vmem [shape: bf16[16,256], index: 0, kind: input, shape index: {}]
  %s1 = inlined_call_operand.vmem [shape: bf16[256,64], index: 1, kind: input, shape index: {}]
  %s2 = inlined_call_operand.hbm [shape: f32[1,64], index: 2, kind: input, shape index: {}]
  %s3 = inlined_call_operand.vmem [shape: bf16[64,32], index: 3, kind: input, shape index: {}]
  %s4 = inlined_call_operand.hbm [shape: f32[1,32], index: 4, kind: input, shape index: {}]
  %s5 = inlined_call_operand.hbm [shape: bf16[32,128], index: 5, kind: input, shape index: {}]
  %s6 = inlined_call_operand.vmem [shape: bf16[16,128], index: 6, kind: output, shape index: {}]
  %s7 = sld [smem:[#allocation0]]
  $region69: #{forward.2} parent=0
    _
  %s9 = ssub.s32 1, %s7
  %s10 = scalar_select 0, %s9, %s7
  $region1: #{forward.2} parent=0
    #allocation2 [shape = 'u8[512]{0}', space=vmem, size = 0x400, scoped, tag = 'input window, operand 2, single buffered']
    #allocation3 [shape = 's32[2]{0}', space=sflag, size = 0x8, scoped, tag = 'scoped memory for forward.2']
    #allocation4 [shape = 'u8[512]{0}', space=vmem, size = 0x400, scoped, tag = 'input window, operand 4, single buffered']
    #allocation5 [shape = 's32[1]{0}', space=sflag, size = 0x4, scoped, tag = 'scoped memory for forward.2']
    #allocation6 [shape = 'u8[8192]{0}', space=vmem, size = 0x2000, scoped, tag = 'input window, operand 5, single buffered']
    %11 = vsyncpa [#allocation3], 0
    %12 = vsyncpa [#allocation5], 0
    loop: start=0, step=1, limit=4
    $region2: #{forward.2} parent=1 // loop_pre_header
      _
    $region3: #{forward.2} parent=1 // loop_header
      %s14 = sphi 0, %s18
      %p15 = scmp.ge.s32.totalorder %s14, 4
      %s24 = sphi 0, %s26
      %s27 = sphi 0, %s24
      %s28 = sphi 0, %s27
      %s44 = sphi 0, %s28
      %s48 = sphi 0, %s48
      %s50 = sphi 0, %s48
      %s51 = sphi 0, %s50
      %s65 = sphi 0, %s51
      %s69 = sphi 0, %s69
      %s71 = sphi 0, %s69
      %s72 = sphi 0, %s71
      %s86 = sphi 0, %s72
      %s90 = sphi 0, %s90
      %s92 = sphi 0, %s90
      %s93 = sphi 0, %s92
      %s107 = sphi 0, %s93
      %s111 = sphi 0, %s111
      %s113 = sphi 0, %s111
      %s114 = sphi 0, %s113
      %s128 = sphi 0, %s114
      %s132 = sphi 0, %s132
      %s134 = sphi 0, %s132
      %s135 = sphi 0, %s134
      %s149 = sphi 0, %s135
      %s155 = sphi 0, %s157
      %s158 = sphi 0, %s155
      %s159 = sphi 0, %s158
      %s175 = sphi 0, %s159
    $region4: #{forward.2} parent=1 // loop_header_branch
      %17 = sbr.rel (%p15) target = $region8
    $region5: #{forward.2} parent=1 // loop_body
      %s19 = ssub.s32 %s14, 1
      %s20 = ssub.s32 %s14, 2
      %s21 = sadd.s32 %s14, 1
      %s22 = ssub.s32 %s14, %s21
      %p23 = scmp.eq.s32.totalorder %s22, 0
      %s25 = sadd.s32 %s24, 1
      %s26 = scalar_select %p23, %s24, %s25
      %p29 = pneg %p23
      %p30 = scmp.eq.s32.totalorder %s14, 1
      %p31 = por %p29, %p30
      %p32 = scmp.ne.s32.totalorder %s24, %s27
      %p33 = scmp.eq.s32.totalorder %s14, 0
      %p34 = por %p32, %p33
      %p35 = scmp.ne.s32.totalorder %s24, %s27
      %p36 = scmp.eq.s32.totalorder %s19, 1
      %p37 = por %p35, %p36
      %p38 = scmp.ne.s32.totalorder %s27, %s28
      %p39 = scmp.eq.s32.totalorder %s19, 0
      %p40 = por %p38, %p39
      %p41 = scmp.ne.s32.totalorder %s27, %s28
      %p42 = scmp.eq.s32.totalorder %s20, 1
      %p43 = por %p41, %p42
      %p45 = scmp.ne.s32.totalorder %s28, %s44
      %p46 = scmp.eq.s32.totalorder %s20, 0
      %p47 = por %p45, %p46
      %s49 = sadd.s32 %s48, 1
      %p52 = scmp.eq.s32.totalorder %s14, 1
      %p53 = scmp.ne.s32.totalorder %s48, %s50
      %p54 = scmp.eq.s32.totalorder %s14, 0
      %p55 = por %p53, %p54
      %p56 = scmp.ne.s32.totalorder %s48, %s50
      %p57 = scmp.eq.s32.totalorder %s19, 1
      %p58 = por %p56, %p57
      %p59 = scmp.ne.s32.totalorder %s50, %s51
      %p60 = scmp.eq.s32.totalorder %s19, 0
      %p61 = por %p59, %p60
      %p62 = scmp.ne.s32.totalorder %s50, %s51
      %p63 = scmp.eq.s32.totalorder %s20, 1
      %p64 = por %p62, %p63
      %p66 = scmp.ne.s32.totalorder %s51, %s65
      %p67 = scmp.eq.s32.totalorder %s20, 0
      %p68 = por %p66, %p67
      %s70 = sadd.s32 %s69, 1
      %p73 = scmp.eq.s32.totalorder %s14, 1
      %p74 = scmp.ne.s32.totalorder %s69, %s71
      %p75 = scmp.eq.s32.totalorder %s14, 0
      %p76 = por %p74, %p75
      %p77 = scmp.ne.s32.totalorder %s69, %s71
      %p78 = scmp.eq.s32.totalorder %s19, 1
      %p79 = por %p77, %p78
      %p80 = scmp.ne.s32.totalorder %s71, %s72
      %p81 = scmp.eq.s32.totalorder %s19, 0
      %p82 = por %p80, %p81
      %p83 = scmp.ne.s32.totalorder %s71, %s72
      %p84 = scmp.eq.s32.totalorder %s20, 1
      %p85 = por %p83, %p84
      %p87 = scmp.ne.s32.totalorder %s72, %s86
      %p88 = scmp.eq.s32.totalorder %s20, 0
      %p89 = por %p87, %p88
      %s91 = sadd.s32 %s90, 1
      %p94 = scmp.eq.s32.totalorder %s14, 1
      %p95 = scmp.ne.s32.totalorder %s90, %s92
      %p96 = scmp.eq.s32.totalorder %s14, 0
      %p97 = por %p95, %p96
      %p98 = scmp.ne.s32.totalorder %s90, %s92
      %p99 = scmp.eq.s32.totalorder %s19, 1
      %p100 = por %p98, %p99
      %p101 = scmp.ne.s32.totalorder %s92, %s93
      %p102 = scmp.eq.s32.totalorder %s19, 0
      %p103 = por %p101, %p102
      %p104 = scmp.ne.s32.totalorder %s92, %s93
      %p105 = scmp.eq.s32.totalorder %s20, 1
      %p106 = por %p104, %p105
      %p108 = scmp.ne.s32.totalorder %s93, %s107
      %p109 = scmp.eq.s32.totalorder %s20, 0
      %p110 = por %p108, %p109
      %s112 = sadd.s32 %s111, 1
      %p115 = scmp.eq.s32.totalorder %s14, 1
      %p116 = scmp.ne.s32.totalorder %s111, %s113
      %p117 = scmp.eq.s32.totalorder %s14, 0
      %p118 = por %p116, %p117
      %p119 = scmp.ne.s32.totalorder %s111, %s113
      %p120 = scmp.eq.s32.totalorder %s19, 1
      %p121 = por %p119, %p120
      %p122 = scmp.ne.s32.totalorder %s113, %s114
      %p123 = scmp.eq.s32.totalorder %s19, 0
      %p124 = por %p122, %p123
      %p125 = scmp.ne.s32.totalorder %s113, %s114
      %p126 = scmp.eq.s32.totalorder %s20, 1
      %p127 = por %p125, %p126
      %p129 = scmp.ne.s32.totalorder %s114, %s128
      %p130 = scmp.eq.s32.totalorder %s20, 0
      %p131 = por %p129, %p130
      %s133 = sadd.s32 %s132, 1
      %p136 = scmp.eq.s32.totalorder %s14, 1
      %p137 = scmp.ne.s32.totalorder %s132, %s134
      %p138 = scmp.eq.s32.totalorder %s14, 0
      %p139 = por %p137, %p138
      %p140 = scmp.ne.s32.totalorder %s132, %s134
      %p141 = scmp.eq.s32.totalorder %s19, 1
      %p142 = por %p140, %p141
      %p143 = scmp.ne.s32.totalorder %s134, %s135
      %p144 = scmp.eq.s32.totalorder %s19, 0
      %p145 = por %p143, %p144
      %p146 = scmp.ne.s32.totalorder %s134, %s135
      %p147 = scmp.eq.s32.totalorder %s20, 1
      %p148 = por %p146, %p147
      %p150 = scmp.ne.s32.totalorder %s135, %s149
      %p151 = scmp.eq.s32.totalorder %s20, 0
      %p152 = por %p150, %p151
      %s153 = ssub.s32 %s14, %s21
      %p154 = scmp.eq.s32.totalorder %s153, 0
      %s156 = sadd.s32 %s155, 1
      %s157 = scalar_select %p154, %s155, %s156
      %p160 = pneg %p154
      %p161 = scmp.eq.s32.totalorder %s14, 1
      %p162 = por %p160, %p161
      %p163 = scmp.ne.s32.totalorder %s155, %s158
      %p164 = scmp.eq.s32.totalorder %s14, 0
      %p165 = por %p163, %p164
      %p166 = scmp.ne.s32.totalorder %s155, %s158
      %p167 = scmp.eq.s32.totalorder %s19, 1
      %p168 = por %p166, %p167
      %p169 = scmp.ne.s32.totalorder %s158, %s159
      %p170 = scmp.eq.s32.totalorder %s19, 0
      %p171 = por %p169, %p170
      %p172 = scmp.ne.s32.totalorder %s158, %s159
      %p173 = scmp.eq.s32.totalorder %s20, 1
      %p174 = por %p172, %p173
      %p176 = scmp.ne.s32.totalorder %s159, %s175
      %p177 = scmp.eq.s32.totalorder %s20, 0
      %p178 = por %p176, %p177
      %p179 = scmp.le.s32.totalorder 1, %s14
      %p180 = scmp.lt.s32.totalorder %s14, 3
      %p181 = pnand %p179, %p180
      %p182 = pneg %p181
      // Predicated region
      $region9: #{forward.2} parent=5 // pred_check
        _
      $region10: #{forward.2} parent=5 // pred_check_branch
        %184 = sbr.rel (%p181) target = $region12
      $region11: #{forward.2} parent=5 // pred_region
        %s185 = ssub.s32 %s14, 1
        // Predicated region
        $region13: #{forward.2} parent=11 // pred_check
          %p186 = pneg %p61
        $region14: #{forward.2} parent=11 // pred_check_branch
          %188 = sbr.rel (%p186) target = $region16
        $region15: #{forward.2} parent=11 // pred_region
          _
        $region16: #{forward.2} parent=11 // pred_fallthru
          _
        // Predicated region
        $region17: #{forward.2} parent=11 // pred_check
          %p189 = pneg %p82
        $region18: #{forward.2} parent=11 // pred_check_branch
          %191 = sbr.rel (%p189) target = $region20
        $region19: #{forward.2} parent=11 // pred_region
          %s193 = ssub.s32 16, 16
          %194 = vsyncadd [#allocation3], %s193
          %s196 = sshll.u32 [#allocation2], 4
          %s197 = int_to_ptr.vmem [resolvable:$true] %s196
          %199 = dma.hbm_to_vmem [thread:$0]  %s2, 16, %s197, [#allocation3]
        $region20: #{forward.2} parent=11 // pred_fallthru
          _
        // Predicated region
        $region21: #{forward.2} parent=11 // pred_check
          %p200 = pneg %p103
        $region22: #{forward.2} parent=11 // pred_check_branch
          %202 = sbr.rel (%p200) target = $region24
        $region23: #{forward.2} parent=11 // pred_region
          _
        $region24: #{forward.2} parent=11 // pred_fallthru
          _
        // Predicated region
        $region25: #{forward.2} parent=11 // pred_check
          %p203 = pneg %p124
        $region26: #{forward.2} parent=11 // pred_check_branch
          %205 = sbr.rel (%p203) target = $region28
        $region27: #{forward.2} parent=11 // pred_region
          %s207 = ssub.s32 16, 16
          %208 = vsyncadd [#allocation5], %s207
          %s210 = sshll.u32 [#allocation4], 4
          %s211 = int_to_ptr.vmem [resolvable:$true] %s210
          %213 = dma.hbm_to_vmem [thread:$0]  %s4, 16, %s211, [#allocation5]
        $region28: #{forward.2} parent=11 // pred_fallthru
          _
        // Predicated region
        $region29: #{forward.2} parent=11 // pred_check
          %p214 = pneg %p145
        $region30: #{forward.2} parent=11 // pred_check_branch
          %216 = sbr.rel (%p214) target = $region32
        $region31: #{forward.2} parent=11 // pred_region
          %s218 = ssub.s32 256, 256
          %219 = vsyncadd [#allocation5], %s218
          %s220 = sshll.u32 [#allocation6], 4
          %s221 = int_to_ptr.vmem [resolvable:$true] %s220
          %226 = dma.hbm_to_vmem [thread:$0]  %s5, 256, %s221, [#allocation5], 64, 64, 4
        $region32: #{forward.2} parent=11 // pred_fallthru
          _
      $region12: #{forward.2} parent=5 // pred_fallthru
        _
      %p227 = scmp.lt.s32.totalorder %s14, 2
      // Predicated region
      $region33: #{forward.2} parent=5 // pred_check
        %p228 = pneg %p227
      $region34: #{forward.2} parent=5 // pred_check_branch
        %230 = sbr.rel (%p228) target = $region36
      $region35: #{forward.2} parent=5 // pred_region
        // Predicated region
        $region37: #{forward.2} parent=35 // pred_check
          %p231 = pneg %p34
        $region38: #{forward.2} parent=35 // pred_check_branch
          %233 = sbr.rel (%p231) target = $region40
        $region39: #{forward.2} parent=35 // pred_region
          %p234 = scmp.lt.s32.totalorder %s14, 1
          %s235 = scalar_select %p234, %s14, 1
          %s236 = smul.addr %s235, 2
          %s237 = smul.addr %s236, 4
          %s238 = scalar_lea.vmem %s0, %s237
        $region40: #{forward.2} parent=35 // pred_fallthru
          _
      $region36: #{forward.2} parent=5 // pred_fallthru
        _
      %p239 = scmp.le.s32.totalorder 1, %s14
      %p240 = scmp.lt.s32.totalorder %s14, 3
      %p241 = pnand %p239, %p240
      %p242 = pneg %p241
      // Predicated region
      $region41: #{forward.2} parent=5 // pred_check
        _
      $region42: #{forward.2} parent=5 // pred_check_branch
        %244 = sbr.rel (%p241) target = $region44
      $region43: #{forward.2} parent=5 // pred_region
        %s245 = ssub.s32 %s14, 1
        // Predicated region
        $region45: #{forward.2} parent=43 // pred_check
          %p246 = pneg %p82
        $region46: #{forward.2} parent=43 // pred_check_branch
          %248 = sbr.rel (%p246) target = $region48
        $region47: #{forward.2} parent=43 // pred_region
          %249 = dma.done [#allocation3], 16
        $region48: #{forward.2} parent=43 // pred_fallthru
          _
        // Predicated region
        $region49: #{forward.2} parent=43 // pred_check
          %p250 = pneg %p124
        $region50: #{forward.2} parent=43 // pred_check_branch
          %252 = sbr.rel (%p250) target = $region52
        $region51: #{forward.2} parent=43 // pred_region
          %253 = dma.done [#allocation5], 16
        $region52: #{forward.2} parent=43 // pred_fallthru
          _
        // Predicated region
        $region53: #{forward.2} parent=43 // pred_check
          %p254 = pneg %p145
        $region54: #{forward.2} parent=43 // pred_check_branch
          %256 = sbr.rel (%p254) target = $region56
        $region55: #{forward.2} parent=43 // pred_region
          %257 = dma.done [#allocation5], 256
        $region56: #{forward.2} parent=43 // pred_fallthru
          _
        %p258 = scmp.lt.s32.totalorder %s19, 1
        %s259 = scalar_select %p258, %s19, 1
        %s260 = smul.addr %s259, 2
        %s261 = smul.addr %s260, 4
        %s262 = scalar_lea.vmem %s0, %s261
        %p263 = pneg %p40
        %p264 = pneg %p37
        %p265 = pneg %p61
        %p266 = pneg %p58
        %p267 = pneg %p82
        %p268 = pneg %p79
        %p269 = pneg %p103
        %p270 = pneg %p100
        %p271 = pneg %p124
        %p272 = pneg %p121
        %p273 = pneg %p145
        %p274 = pneg %p142
        %p275 = pneg %p171
        %p276 = pneg %p168
        %p277 = scmp.lt.s32.totalorder %s19, 1
        %s278 = scalar_select %p277, %s19, 1
        %s279 = smul.addr %s278, 4
        %s280 = scalar_lea.vmem %s6, %s279
        %p281 = scmp.lt.s32.totalorder %s19, 1
        %s282 = scalar_select %p281, %s19, 1
        %s283 = smul.addr %s282, 2
        %s284 = smul.addr %s283, 4
        %s285 = scalar_lea.vmem %s0, %s284
        %p286 = scmp.lt.s32.totalorder %s19, 1
        %s287 = scalar_select %p286, %s19, 1
        %s288 = smul.addr %s287, 4
        %s289 = scalar_lea.vmem %s6, %s288
        %v291 = vld [vmem:[%s285] sm:$0xff]
        %v292 = vld [vmem:[%s1] sm:$0xf]
        %v293 = vld [vmem:[%s1 + $0x4] sm:$0xf]
        %v294 = vld [vmem:[%s1 + $0x8] sm:$0xf]
        %v295 = vld [vmem:[%s1 + $0xc] sm:$0xf]
        %v296 = vld [vmem:[%s1 + $0x10] sm:$0xf]
        %v297 = vld [vmem:[%s1 + $0x14] sm:$0xf]
        %v298 = vld [vmem:[%s1 + $0x18] sm:$0xf]
        %v299 = vld [vmem:[%s1 + $0x1c] sm:$0xf]
        %v300 = vld [vmem:[%s1 + $0x20] sm:$0xf]
        %v301 = vld [vmem:[%s1 + $0x24] sm:$0xf]
        %v302 = vld [vmem:[%s1 + $0x28] sm:$0xf]
        %v303 = vld [vmem:[%s1 + $0x2c] sm:$0xf]
        %v304 = vld [vmem:[%s1 + $0x30] sm:$0xf]
        %v305 = vld [vmem:[%s1 + $0x34] sm:$0xf]
        %v306 = vld [vmem:[%s1 + $0x38] sm:$0xf]
        %v307 = vld [vmem:[%s1 + $0x3c] sm:$0xf]
        %v308 = vld [vmem:[%s1 + $0x40] sm:$0xf]
        %v309 = vld [vmem:[%s1 + $0x44] sm:$0xf]
        %v310 = vld [vmem:[%s1 + $0x48] sm:$0xf]
        %v311 = vld [vmem:[%s1 + $0x4c] sm:$0xf]
        %v312 = vld [vmem:[%s1 + $0x50] sm:$0xf]
        %v313 = vld [vmem:[%s1 + $0x54] sm:$0xf]
        %v314 = vld [vmem:[%s1 + $0x58] sm:$0xf]
        %v315 = vld [vmem:[%s1 + $0x5c] sm:$0xf]
        %v316 = vld [vmem:[%s1 + $0x60] sm:$0xf]
        %v317 = vld [vmem:[%s1 + $0x64] sm:$0xf]
        %v318 = vld [vmem:[%s1 + $0x68] sm:$0xf]
        %v319 = vld [vmem:[%s1 + $0x6c] sm:$0xf]
        %v320 = vld [vmem:[%s1 + $0x70] sm:$0xf]
        %v321 = vld [vmem:[%s1 + $0x74] sm:$0xf]
        %v322 = vld [vmem:[%s1 + $0x78] sm:$0xf]
        %v323 = vld [vmem:[%s1 + $0x7c] sm:$0xf]
        %v324 = vld [vmem:[#allocation2] sm:$0x1]
        %v326 = vlaneseq
        %v327 = vshrl.u32 %v326, 7
        %v328 = vsub.s32 0, %v327
        %v329 = vrot.slane %v324, %v328
        %v332 = vunpack.c.l.b16 %v291
        %v333 = vunpack.c.h.b16 %v291
        %v334 = vpack.c.b16 %v332, %v332
        %v335 = vpack.c.b16 %v333, %v333
        %v370 = vunpack.c.l.b16 %v292
        %v371 = vunpack.c.l.b16 %v293
        %v372 = vunpack.c.l.b16 %v294
        %v373 = vunpack.c.l.b16 %v295
        %v374 = vunpack.c.l.b16 %v296
        %v375 = vunpack.c.l.b16 %v297
        %v376 = vunpack.c.l.b16 %v298
        %v377 = vunpack.c.l.b16 %v299
        %v378 = vunpack.c.l.b16 %v300
        %v379 = vunpack.c.l.b16 %v301
        %v380 = vunpack.c.l.b16 %v302
        %v381 = vunpack.c.l.b16 %v303
        %v382 = vunpack.c.l.b16 %v304
        %v383 = vunpack.c.l.b16 %v305
        %v384 = vunpack.c.l.b16 %v306
        %v385 = vunpack.c.l.b16 %v307
        %v386 = vunpack.c.l.b16 %v308
        %v387 = vunpack.c.l.b16 %v309
        %v388 = vunpack.c.l.b16 %v310
        %v389 = vunpack.c.l.b16 %v311
        %v390 = vunpack.c.l.b16 %v312
        %v391 = vunpack.c.l.b16 %v313
        %v392 = vunpack.c.l.b16 %v314
        %v393 = vunpack.c.l.b16 %v315
        %v394 = vunpack.c.l.b16 %v316
        %v395 = vunpack.c.l.b16 %v317
        %v396 = vunpack.c.l.b16 %v318
        %v397 = vunpack.c.l.b16 %v319
        %v398 = vunpack.c.l.b16 %v320
        %v399 = vunpack.c.l.b16 %v321
        %v400 = vunpack.c.l.b16 %v322
        %v401 = vunpack.c.l.b16 %v323
        %v402 = vpack.c.b16 %v371, %v370
        %v403 = vpack.c.b16 %v373, %v372
        %v404 = vpack.c.b16 %v375, %v374
        %v405 = vpack.c.b16 %v377, %v376
        %v406 = vpack.c.b16 %v379, %v378
        %v407 = vpack.c.b16 %v381, %v380
        %v408 = vpack.c.b16 %v383, %v382
        %v409 = vpack.c.b16 %v385, %v384
        %v410 = vpack.c.b16 %v387, %v386
        %v411 = vpack.c.b16 %v389, %v388
        %v412 = vpack.c.b16 %v391, %v390
        %v413 = vpack.c.b16 %v393, %v392
        %v414 = vpack.c.b16 %v395, %v394
        %v415 = vpack.c.b16 %v397, %v396
        %v416 = vpack.c.b16 %v399, %v398
        %v417 = vpack.c.b16 %v401, %v400
        %434 = vmatprep.subr.bf16.mxu0 0
        %435 = vmatpush1.bf16.msra.mxu0 %v402
        %436 = vmatprep.subr.bf16.mxu0 0
        %437 = vmatpush1.bf16.msra.mxu0 %v403
        %438 = vmatprep.subr.bf16.mxu0 0
        %439 = vmatpush1.bf16.msra.mxu0 %v404
        %440 = vmatprep.subr.bf16.mxu0 0
        %441 = vmatpush1.bf16.msra.mxu0 %v405
        %442 = vmatprep.subr.bf16.mxu0 0
        %443 = vmatpush1.bf16.msra.mxu0 %v406
        %444 = vmatprep.subr.bf16.mxu0 0
        %445 = vmatpush1.bf16.msra.mxu0 %v407
        %446 = vmatprep.subr.bf16.mxu0 0
        %447 = vmatpush1.bf16.msra.mxu0 %v408
        %448 = vmatprep.subr.bf16.mxu0 0
        %449 = vmatpush1.bf16.msra.mxu0 %v409
        %450 = vmatprep.subr.bf16.mxu0 0
        %451 = vmatpush1.bf16.msra.mxu0 %v410
        %452 = vmatprep.subr.bf16.mxu0 0
        %453 = vmatpush1.bf16.msra.mxu0 %v411
        %454 = vmatprep.subr.bf16.mxu0 0
        %455 = vmatpush1.bf16.msra.mxu0 %v412
        %456 = vmatprep.subr.bf16.mxu0 0
        %457 = vmatpush1.bf16.msra.mxu0 %v413
        %458 = vmatprep.subr.bf16.mxu0 0
        %459 = vmatpush1.bf16.msra.mxu0 %v414
        %460 = vmatprep.subr.bf16.mxu0 0
        %461 = vmatpush1.bf16.msra.mxu0 %v415
        %462 = vmatprep.subr.bf16.mxu0 0
        %463 = vmatpush1.bf16.msra.mxu0 %v416
        %464 = vmatprep.subr.bf16.mxu0 0
        %465 = vmatpush1.bf16.msra.mxu0 %v417
        %466 = vmatprep.mubr.bf16.mxu0 %v335
        %467 = vmatmul.mubr.bf16.gmra.mrb[0].mxu0 %v334
        %v468 = vpop.f32.mrb[0].mxu0
        %v469 = vadd.f32 %v329, %v468
        %v470 = vpop.f32.mrb[0].mxu0
        %v471 = vpop.f32.mrb[0].mxu0
        %v472 = vpop.f32.mrb[0].mxu0
        %473 = vdwg.mxu0
        %v474 = vmax.f32 %v469, 0.0
        %v475 = vpack.c.bf16 %v474, %v474
        %v476 = vld [vmem:[%s3] sm:$0xf]
        %v477 = vld [vmem:[%s3 + $0x4] sm:$0xf]
        %v478 = vld [vmem:[%s3 + $0x8] sm:$0xf]
        %v479 = vld [vmem:[%s3 + $0xc] sm:$0xf]
        %v480 = vld [vmem:[%s3 + $0x10] sm:$0xf]
        %v481 = vld [vmem:[%s3 + $0x14] sm:$0xf]
        %v482 = vld [vmem:[%s3 + $0x18] sm:$0xf]
        %v483 = vld [vmem:[%s3 + $0x1c] sm:$0xf]
        %v484 = vld [vmem:[#allocation4] sm:$0x1]
        %v486 = vlaneseq
        %v487 = vshrl.u32 %v486, 7
        %v488 = vsub.s32 0, %v487
        %v489 = vrot.slane %v484, %v488
        %v499 = vunpack.c.l.b16 %v476
        %v500 = vunpack.c.l.b16 %v477
        %v501 = vunpack.c.l.b16 %v478
        %v502 = vunpack.c.l.b16 %v479
        %v503 = vunpack.c.l.b16 %v480
        %v504 = vunpack.c.l.b16 %v481
        %v505 = vunpack.c.l.b16 %v482
        %v506 = vunpack.c.l.b16 %v483
        %v507 = vpack.c.b16 %v500, %v499
        %v508 = vpack.c.b16 %v502, %v501
        %v509 = vpack.c.b16 %v504, %v503
        %v510 = vpack.c.b16 %v506, %v505
        %vm515 = vcmask 523264
        %v517 = vsel %vm515, %v475, 0
        %519 = vmatprep.subr.bf16.mxu0 0
        %520 = vmatpush1.bf16.msra.mxu0 %v507
        %521 = vmatprep.subr.bf16.mxu0 0
        %522 = vmatpush1.bf16.msra.mxu0 %v508
        %523 = vmatprep.subr.bf16.mxu0 0
        %524 = vmatpush1.bf16.msra.mxu0 %v509
        %525 = vmatprep.subr.bf16.mxu0 0
        %526 = vmatpush1.bf16.msra.mxu0 %v510
        %527 = vmatprep.subr.bf16.mxu0 0
        %528 = vmatpush1.bf16.msra.mxu0 0
        %529 = vmatprep.subr.bf16.mxu0 0
        %530 = vmatpush1.bf16.msra.mxu0 0
        %531 = vmatprep.subr.bf16.mxu0 0
        %532 = vmatpush1.bf16.msra.mxu0 0
        %533 = vmatprep.subr.bf16.mxu0 0
        %534 = vmatpush1.bf16.msra.mxu0 0
        %535 = vmatprep.subr.bf16.mxu0 0
        %536 = vmatpush1.bf16.msra.mxu0 0
        %537 = vmatprep.subr.bf16.mxu0 0
        %538 = vmatpush1.bf16.msra.mxu0 0
        %539 = vmatprep.subr.bf16.mxu0 0
        %540 = vmatpush1.bf16.msra.mxu0 0
        %541 = vmatprep.subr.bf16.mxu0 0
        %542 = vmatpush1.bf16.msra.mxu0 0
        %543 = vmatprep.subr.bf16.mxu0 0
        %544 = vmatpush1.bf16.msra.mxu0 0
        %545 = vmatprep.subr.bf16.mxu0 0
        %546 = vmatpush1.bf16.msra.mxu0 0
        %547 = vmatprep.subr.bf16.mxu0 0
        %548 = vmatpush1.bf16.msra.mxu0 0
        %549 = vmatprep.subr.bf16.mxu0 0
        %550 = vmatpush1.bf16.msra.mxu0 0
        %551 = vmatprep.mubr.bf16.mxu0 0
        %552 = vmatmul.mubr.bf16.gmra.mrb[0].mxu0 %v517
        %v553 = vpop.f32.mrb[0].mxu0
        %v554 = vadd.f32 %v489, %v553
        %v555 = vpop.f32.mrb[0].mxu0
        %v556 = vpop.f32.mrb[0].mxu0
        %v557 = vpop.f32.mrb[0].mxu0
        %558 = vdwg.mxu0
        %v559 = vmax.f32 %v554, 0.0
        %v560 = vpack.c.bf16 %v559, %v559
        %v561 = vld [vmem:[#allocation6] sm:$0xf]
        %v562 = vld [vmem:[#allocation6 + $0x4] sm:$0xf]
        %v563 = vld [vmem:[#allocation6 + $0x8] sm:$0xf]
        %v564 = vld [vmem:[#allocation6 + $0xc] sm:$0xf]
        %v569 = vunpack.c.l.b16 %v561
        %v570 = vunpack.c.l.b16 %v562
        %v571 = vunpack.c.l.b16 %v563
        %v572 = vunpack.c.l.b16 %v564
        %v573 = vpack.c.b16 %v570, %v569
        %v574 = vpack.c.b16 %v572, %v571
        %vm577 = vcmask 261120
        %v579 = vsel %vm577, %v560, 0
        %581 = vmatprep.subr.bf16.mxu0 0
        %582 = vmatpush1.bf16.msra.mxu0 %v573
        %583 = vmatprep.subr.bf16.mxu0 0
        %584 = vmatpush1.bf16.msra.mxu0 %v574
        %585 = vmatprep.subr.bf16.mxu0 0
        %586 = vmatpush1.bf16.msra.mxu0 0
        %587 = vmatprep.subr.bf16.mxu0 0
        %588 = vmatpush1.bf16.msra.mxu0 0
        %589 = vmatprep.subr.bf16.mxu0 0
        %590 = vmatpush1.bf16.msra.mxu0 0
        %591 = vmatprep.subr.bf16.mxu0 0
        %592 = vmatpush1.bf16.msra.mxu0 0
        %593 = vmatprep.subr.bf16.mxu0 0
        %594 = vmatpush1.bf16.msra.mxu0 0
        %595 = vmatprep.subr.bf16.mxu0 0
        %596 = vmatpush1.bf16.msra.mxu0 0
        %597 = vmatprep.subr.bf16.mxu0 0
        %598 = vmatpush1.bf16.msra.mxu0 0
        %599 = vmatprep.subr.bf16.mxu0 0
        %600 = vmatpush1.bf16.msra.mxu0 0
        %601 = vmatprep.subr.bf16.mxu0 0
        %602 = vmatpush1.bf16.msra.mxu0 0
        %603 = vmatprep.subr.bf16.mxu0 0
        %604 = vmatpush1.bf16.msra.mxu0 0
        %605 = vmatprep.subr.bf16.mxu0 0
        %606 = vmatpush1.bf16.msra.mxu0 0
        %607 = vmatprep.subr.bf16.mxu0 0
        %608 = vmatpush1.bf16.msra.mxu0 0
        %609 = vmatprep.subr.bf16.mxu0 0
        %610 = vmatpush1.bf16.msra.mxu0 0
        %611 = vmatprep.subr.bf16.mxu0 0
        %612 = vmatpush1.bf16.msra.mxu0 0
        %613 = vmatprep.mubr.bf16.mxu0 0
        %614 = vmatmul.mubr.bf16.gmra.mrb[0].mxu0 %v579
        %v615 = vpop.f32.mrb[0].mxu0
        %v616 = vadd.f32 0.0, %v615
        %v617 = vpop.f32.mrb[0].mxu0
        %v618 = vpop.f32.mrb[0].mxu0
        %v619 = vpop.f32.mrb[0].mxu0
        %620 = vdwg.mxu0
        %v621 = vpack.c.bf16 %v616, %v616
        %622 = vst [vmem:[%s289] sm:$0xf] %v621
        %p623 = scmp.lt.s32.totalorder %s19, 1
        %s624 = scalar_select %p623, %s19, 1
        %s625 = smul.addr %s624, 4
        %s626 = scalar_lea.vmem %s6, %s625
        // Predicated region
        $region57: #{forward.2} parent=43 // pred_check
          %p627 = pneg %p168
        $region58: #{forward.2} parent=43 // pred_check_branch
          %629 = sbr.rel (%p627) target = $region60
        $region59: #{forward.2} parent=43 // pred_region
          _
        $region60: #{forward.2} parent=43 // pred_fallthru
          _
      $region44: #{forward.2} parent=5 // pred_fallthru
        _
      %p630 = scmp.le.s32.totalorder 2, %s14
      // Predicated region
      $region61: #{forward.2} parent=5 // pred_check
        %p631 = pneg %p630
      $region62: #{forward.2} parent=5 // pred_check_branch
        %633 = sbr.rel (%p631) target = $region64
      $region63: #{forward.2} parent=5 // pred_region
        %s634 = ssub.s32 %s14, 2
        // Predicated region
        $region65: #{forward.2} parent=63 // pred_check
          %p635 = pneg %p174
        $region66: #{forward.2} parent=63 // pred_check_branch
          %637 = sbr.rel (%p635) target = $region68
        $region67: #{forward.2} parent=63 // pred_region
          %p638 = scmp.lt.s32.totalorder %s20, 1
          %s639 = scalar_select %p638, %s20, 1
          %s640 = smul.addr %s639, 4
          %s641 = scalar_lea.vmem %s6, %s640
        $region68: #{forward.2} parent=63 // pred_fallthru
          _
      $region64: #{forward.2} parent=5 // pred_fallthru
        _
    $region6: #{forward.2} parent=1 // loop_footer
      %s18 = sadd.s32 1, %s14
    $region7: #{forward.2} parent=1 // loop_footer_branch
      %13 = sbr.rel target = $region3
    $region8: #{forward.2} parent=1 // loop_exit
      _
    %642 = vsyncpa [#allocation3], 1
    %s643 = scalar_lea.sflag [#allocation3], 1
    %644 = vsyncpa %s643, 1
    %645 = vsyncpa [#allocation5], 1

// kernel: forward.3
$region0: #{forward.3}
  #allocation0 [shape = 'u32[]', space=smem, size = 0x4, offset = 0x4, fixed_abs, tag = 'smem constant byte address 0x4 - core index']
  #allocation1 [shape = 'u32[144,128]{1,0:T(1,128)}', space=vmem, size = 0x12000, scoped, tag = 'internal scratch']
  %s0 = inlined_call_operand.vmem [shape: bf16[8,128], index: 0, kind: input, shape index: {}]
  %s1 = inlined_call_operand.vmem [shape: bf16[8,16], index: 1, kind: input, shape index: {}]
  %s2 = inlined_call_operand.vmem [shape: bf16[16,32], index: 2, kind: input, shape index: {}]
  %s3 = inlined_call_operand.vmem [shape: bf16[32,16], index: 3, kind: input, shape index: {}]
  %s4 = inlined_call_operand.vmem [shape: bf16[32,128], index: 4, kind: input, shape index: {}]
  %s5 = inlined_call_operand.vmem [shape: bf16[128,64], index: 5, kind: input, shape index: {}]
  %s6 = inlined_call_operand.vmem [shape: bf16[64,32], index: 6, kind: input, shape index: {}]
  %s7 = inlined_call_operand.vmem [shape: bf16[32,128], index: 7, kind: input, shape index: {}]
  %s8 = inlined_call_operand.vmem [shape: f32[8,128], index: 8, kind: input, shape index: {}]
  %s9 = inlined_call_operand.vmem [shape: bf16[8,128], index: 9, kind: output, shape index: {}]
  %s10 = sld [smem:[#allocation0]]
  $region46: #{forward.3} parent=0
    _
  %s12 = ssub.s32 1, %s10
  %s13 = scalar_select 0, %s12, %s10
  // Predicated region
  $region2: #{forward.3} parent=0 // pred_check
    _
  $region3: #{forward.3} parent=0 // pred_check_branch
    %15 = sbr.rel (0) target = $region5
  $region4: #{forward.3} parent=0 // pred_region
    _
  $region5: #{forward.3} parent=0 // pred_fallthru
    _
  // Predicated region
  $region6: #{forward.3} parent=0 // pred_check
    _
  $region7: #{forward.3} parent=0 // pred_check_branch
    %17 = sbr.rel (0) target = $region9
  $region8: #{forward.3} parent=0 // pred_region
    _
  $region9: #{forward.3} parent=0 // pred_fallthru
    _
  // Predicated region
  $region10: #{forward.3} parent=0 // pred_check
    _
  $region11: #{forward.3} parent=0 // pred_check_branch
    %19 = sbr.rel (0) target = $region13
  $region12: #{forward.3} parent=0 // pred_region
    _
  $region13: #{forward.3} parent=0 // pred_fallthru
    _
  // Predicated region
  $region14: #{forward.3} parent=0 // pred_check
    _
  $region15: #{forward.3} parent=0 // pred_check_branch
    %21 = sbr.rel (0) target = $region17
  $region16: #{forward.3} parent=0 // pred_region
    _
  $region17: #{forward.3} parent=0 // pred_fallthru
    _
  // Predicated region
  $region18: #{forward.3} parent=0 // pred_check
    _
  $region19: #{forward.3} parent=0 // pred_check_branch
    %23 = sbr.rel (0) target = $region21
  $region20: #{forward.3} parent=0 // pred_region
    _
  $region21: #{forward.3} parent=0 // pred_fallthru
    _
  // Predicated region
  $region22: #{forward.3} parent=0 // pred_check
    _
  $region23: #{forward.3} parent=0 // pred_check_branch
    %25 = sbr.rel (0) target = $region25
  $region24: #{forward.3} parent=0 // pred_region
    _
  $region25: #{forward.3} parent=0 // pred_fallthru
    _
  // Predicated region
  $region26: #{forward.3} parent=0 // pred_check
    _
  $region27: #{forward.3} parent=0 // pred_check_branch
    %27 = sbr.rel (0) target = $region29
  $region28: #{forward.3} parent=0 // pred_region
    _
  $region29: #{forward.3} parent=0 // pred_fallthru
    _
  // Predicated region
  $region30: #{forward.3} parent=0 // pred_check
    _
  $region31: #{forward.3} parent=0 // pred_check_branch
    %29 = sbr.rel (0) target = $region33
  $region32: #{forward.3} parent=0 // pred_region
    _
  $region33: #{forward.3} parent=0 // pred_fallthru
    _
  // Predicated region
  $region34: #{forward.3} parent=0 // pred_check
    _
  $region35: #{forward.3} parent=0 // pred_check_branch
    %31 = sbr.rel (0) target = $region37
  $region36: #{forward.3} parent=0 // pred_region
    _
  $region37: #{forward.3} parent=0 // pred_fallthru
    _
  %v33 = vld [vmem:[%s0] sm:$0xf]
  %v34 = vld [vmem:[%s8] sm:$0xff]
  %v35 = vunpack.c.l.bf16 %v33
  %v36 = vld [vmem:[%s1] sm:$0xf]
  %v37 = vlaneseq
  %v38 = vshrl.u32 %v37, 7
  %v39 = vsub.s32 0, %v38
  %v40 = vrot.slane %v34, %v39
  %v42 = vunpack.c.l.b16 %v33
  %v43 = vpack.c.b16 %v42, %v42
  %44 = vrot.lane.b32.xlu0 %v43, 32
  %v45 = vpop.permute.xlu0 %44
  %vm46 = vcmask 64512
  %v48 = vsel %vm46, %v45, 0
  %vm50 = vcmask 1043456
  %v52 = vsel %vm50, %v36, 0
  %54 = vmatprep.subr.bf16.mxu0 0
  %55 = vmatpush1.bf16.msra.mxu0 %v52
  %56 = vmatprep.subr.bf16.mxu0 0
  %57 = vmatpush1.bf16.msra.mxu0 0
  %58 = vmatprep.subr.bf16.mxu0 0
  %59 = vmatpush1.bf16.msra.mxu0 0
  %60 = vmatprep.subr.bf16.mxu0 0
  %61 = vmatpush1.bf16.msra.mxu0 0
  %62 = vmatprep.subr.bf16.mxu0 0
  %63 = vmatpush1.bf16.msra.mxu0 0
  %64 = vmatprep.subr.bf16.mxu0 0
  %65 = vmatpush1.bf16.msra.mxu0 0
  %66 = vmatprep.subr.bf16.mxu0 0
  %67 = vmatpush1.bf16.msra.mxu0 0
  %68 = vmatprep.subr.bf16.mxu0 0
  %69 = vmatpush1.bf16.msra.mxu0 0
  %70 = vmatprep.subr.bf16.mxu0 0
  %71 = vmatpush1.bf16.msra.mxu0 0
  %72 = vmatprep.subr.bf16.mxu0 0
  %73 = vmatpush1.bf16.msra.mxu0 0
  %74 = vmatprep.subr.bf16.mxu0 0
  %75 = vmatpush1.bf16.msra.mxu0 0
  %76 = vmatprep.subr.bf16.mxu0 0
  %77 = vmatpush1.bf16.msra.mxu0 0
  %78 = vmatprep.subr.bf16.mxu0 0
  %79 = vmatpush1.bf16.msra.mxu0 0
  %80 = vmatprep.subr.bf16.mxu0 0
  %81 = vmatpush1.bf16.msra.mxu0 0
  %82 = vmatprep.subr.bf16.mxu0 0
  %83 = vmatpush1.bf16.msra.mxu0 0
  %84 = vmatprep.subr.bf16.mxu0 0
  %85 = vmatpush1.bf16.msra.mxu0 0
  %86 = vmatprep.mubr.bf16.mxu0 0
  %87 = vmatmul.mubr.bf16.gmra.mrb[0].mxu0 %v48
  %v88 = vpop.f32.mrb[0].mxu0
  %v89 = vadd.f32 %v40, %v88
  %v90 = vpop.f32.mrb[0].mxu0
  %v91 = vpop.f32.mrb[0].mxu0
  %v92 = vpop.f32.mrb[0].mxu0
  %93 = vdwg.mxu0
  %v94 = vmax.f32 %v89, 0.0
  %v95 = vpack.c.bf16 %v94, %v94
  %97 = vrot.lane.b32.xlu0 %v35, 96
  %v98 = vpop.permute.xlu0 %97
  %v100 = vadd.f32 %v35, %v98
  %v101 = vld [vmem:[%s2] sm:$0xf]
  %v102 = vld [vmem:[%s2 + $0x4] sm:$0xf]
  %v105 = vunpack.c.l.b16 %v101
  %v106 = vunpack.c.l.b16 %v102
  %v107 = vpack.c.b16 %v106, %v105
  %vm109 = vcmask 130048
  %v111 = vsel %vm109, %v95, 0
  %113 = vmatprep.subr.bf16.mxu0 0
  %114 = vmatpush1.bf16.msra.mxu0 %v107
  %115 = vmatprep.subr.bf16.mxu0 0
  %116 = vmatpush1.bf16.msra.mxu0 0
  %117 = vmatprep.subr.bf16.mxu0 0
  %118 = vmatpush1.bf16.msra.mxu0 0
  %119 = vmatprep.subr.bf16.mxu0 0
  %120 = vmatpush1.bf16.msra.mxu0 0
  %121 = vmatprep.subr.bf16.mxu0 0
  %122 = vmatpush1.bf16.msra.mxu0 0
  %123 = vmatprep.subr.bf16.mxu0 0
  %124 = vmatpush1.bf16.msra.mxu0 0
  %125 = vmatprep.subr.bf16.mxu0 0
  %126 = vmatpush1.bf16.msra.mxu0 0
  %127 = vmatprep.subr.bf16.mxu0 0
  %128 = vmatpush1.bf16.msra.mxu0 0
  %129 = vmatprep.subr.bf16.mxu0 0
  %130 = vmatpush1.bf16.msra.mxu0 0
  %131 = vmatprep.subr.bf16.mxu0 0
  %132 = vmatpush1.bf16.msra.mxu0 0
  %133 = vmatprep.subr.bf16.mxu0 0
  %134 = vmatpush1.bf16.msra.mxu0 0
  %135 = vmatprep.subr.bf16.mxu0 0
  %136 = vmatpush1.bf16.msra.mxu0 0
  %137 = vmatprep.subr.bf16.mxu0 0
  %138 = vmatpush1.bf16.msra.mxu0 0
  %139 = vmatprep.subr.bf16.mxu0 0
  %140 = vmatpush1.bf16.msra.mxu0 0
  %141 = vmatprep.subr.bf16.mxu0 0
  %142 = vmatpush1.bf16.msra.mxu0 0
  %143 = vmatprep.subr.bf16.mxu0 0
  %144 = vmatpush1.bf16.msra.mxu0 0
  %145 = vmatprep.mubr.bf16.mxu0 0
  %146 = vmatmul.mubr.bf16.gmra.mrb[0].mxu0 %v111
  %v147 = vpop.f32.mrb[0].mxu0
  %v148 = vadd.f32 0.0, %v147
  %v149 = vpop.f32.mrb[0].mxu0
  %v150 = vpop.f32.mrb[0].mxu0
  %v151 = vpop.f32.mrb[0].mxu0
  %152 = vdwg.mxu0
  %v153 = vadd.f32 %v100, %v148
  %v154 = vlaneseq
  %v155 = vshrl.u32 %v154, 7
  %v156 = vsub.s32 1, %v155
  %v157 = vrot.slane %v34, %v156
  %v158 = vadd.f32 %v153, %v157
  %v159 = vmax.f32 %v158, 0.0
  %v160 = vpack.c.bf16 %v159, %v159
  %v161 = vld [vmem:[%s3] sm:$0xf]
  %v162 = vld [vmem:[%s3 + $0x4] sm:$0xf]
  %v163 = vld [vmem:[%s3 + $0x8] sm:$0xf]
  %v164 = vld [vmem:[%s3 + $0xc] sm:$0xf]
  %v165 = vlaneseq
  %v166 = vshrl.u32 %v165, 7
  %v167 = vsub.s32 2, %v166
  %v168 = vrot.slane %v34, %v167
  %v173 = vunpack.c.l.b16 %v161
  %v174 = vunpack.c.l.b16 %v162
  %v175 = vunpack.c.l.b16 %v163
  %v176 = vunpack.c.l.b16 %v164
  %v177 = vpack.c.b16 %v174, %v173
  %v178 = vpack.c.b16 %v176, %v175
  %vm181 = vcmask 261120
  %v183 = vsel %vm181, %v160, 0
  %185 = vmatprep.subr.bf16.mxu0 0
  %186 = vmatpush1.bf16.msra.mxu0 %v177
  %187 = vmatprep.subr.bf16.mxu0 0
  %188 = vmatpush1.bf16.msra.mxu0 %v178
  %189 = vmatprep.subr.bf16.mxu0 0
  %190 = vmatpush1.bf16.msra.mxu0 0
  %191 = vmatprep.subr.bf16.mxu0 0
  %192 = vmatpush1.bf16.msra.mxu0 0
  %193 = vmatprep.subr.bf16.mxu0 0
  %194 = vmatpush1.bf16.msra.mxu0 0
  %195 = vmatprep.subr.bf16.mxu0 0
  %196 = vmatpush1.bf16.msra.mxu0 0
  %197 = vmatprep.subr.bf16.mxu0 0
  %198 = vmatpush1.bf16.msra.mxu0 0
  %199 = vmatprep.subr.bf16.mxu0 0
  %200 = vmatpush1.bf16.msra.mxu0 0
  %201 = vmatprep.subr.bf16.mxu0 0
  %202 = vmatpush1.bf16.msra.mxu0 0
  %203 = vmatprep.subr.bf16.mxu0 0
  %204 = vmatpush1.bf16.msra.mxu0 0
  %205 = vmatprep.subr.bf16.mxu0 0
  %206 = vmatpush1.bf16.msra.mxu0 0
  %207 = vmatprep.subr.bf16.mxu0 0
  %208 = vmatpush1.bf16.msra.mxu0 0
  %209 = vmatprep.subr.bf16.mxu0 0
  %210 = vmatpush1.bf16.msra.mxu0 0
  %211 = vmatprep.subr.bf16.mxu0 0
  %212 = vmatpush1.bf16.msra.mxu0 0
  %213 = vmatprep.subr.bf16.mxu0 0
  %214 = vmatpush1.bf16.msra.mxu0 0
  %215 = vmatprep.subr.bf16.mxu0 0
  %216 = vmatpush1.bf16.msra.mxu0 0
  %217 = vmatprep.mubr.bf16.mxu0 0
  %218 = vmatmul.mubr.bf16.gmra.mrb[0].mxu0 %v183
  %v219 = vpop.f32.mrb[0].mxu0
  %v220 = vadd.f32 %v168, %v219
  %v221 = vpop.f32.mrb[0].mxu0
  %v222 = vpop.f32.mrb[0].mxu0
  %v223 = vpop.f32.mrb[0].mxu0
  %224 = vdwg.mxu0
  %v225 = vmax.f32 %v220, 0.0
  %v226 = vpack.c.bf16 %v225, %v225
  %227 = vrot.lane.b32.xlu0 %v43, 24
  %v228 = vpop.permute.xlu0 %227
  %v230 = vsel %vm46, %v228, 0
  %232 = vmatprep.subr.bf16.mxu0 0
  %233 = vmatpush1.bf16.msra.mxu0 %v52
  %234 = vmatprep.subr.bf16.mxu0 0
  %235 = vmatpush1.bf16.msra.mxu0 0
  %236 = vmatprep.subr.bf16.mxu0 0
  %237 = vmatpush1.bf16.msra.mxu0 0
  %238 = vmatprep.subr.bf16.mxu0 0
  %239 = vmatpush1.bf16.msra.mxu0 0
  %240 = vmatprep.subr.bf16.mxu0 0
  %241 = vmatpush1.bf16.msra.mxu0 0
  %242 = vmatprep.subr.bf16.mxu0 0
  %243 = vmatpush1.bf16.msra.mxu0 0
  %244 = vmatprep.subr.bf16.mxu0 0
  %245 = vmatpush1.bf16.msra.mxu0 0
  %246 = vmatprep.subr.bf16.mxu0 0
  %247 = vmatpush1.bf16.msra.mxu0 0
  %248 = vmatprep.subr.bf16.mxu0 0
  %249 = vmatpush1.bf16.msra.mxu0 0
  %250 = vmatprep.subr.bf16.mxu0 0
  %251 = vmatpush1.bf16.msra.mxu0 0
  %252 = vmatprep.subr.bf16.mxu0 0
  %253 = vmatpush1.bf16.msra.mxu0 0
  %254 = vmatprep.subr.bf16.mxu0 0
  %255 = vmatpush1.bf16.msra.mxu0 0
  %256 = vmatprep.subr.bf16.mxu0 0
  %257 = vmatpush1.bf16.msra.mxu0 0
  %258 = vmatprep.subr.bf16.mxu0 0
  %259 = vmatpush1.bf16.msra.mxu0 0
  %260 = vmatprep.subr.bf16.mxu0 0
  %261 = vmatpush1.bf16.msra.mxu0 0
  %262 = vmatprep.subr.bf16.mxu0 0
  %263 = vmatpush1.bf16.msra.mxu0 0
  %264 = vmatprep.mubr.bf16.mxu0 0
  %265 = vmatmul.mubr.bf16.gmra.mrb[0].mxu0 %v230
  %v266 = vpop.f32.mrb[0].mxu0
  %v267 = vadd.f32 %v40, %v266
  %v268 = vpop.f32.mrb[0].mxu0
  %v269 = vpop.f32.mrb[0].mxu0
  %v270 = vpop.f32.mrb[0].mxu0
  %271 = vdwg.mxu0
  %v272 = vmax.f32 %v267, 0.0
  %v273 = vpack.c.bf16 %v272, %v272
  %274 = vrot.lane.b32.xlu0 %v35, 64
  %v275 = vpop.permute.xlu0 %274
  %v277 = vadd.f32 %v35, %v275
  %v279 = vsel %vm109, %v273, 0
  %281 = vmatprep.subr.bf16.mxu0 0
  %282 = vmatpush1.bf16.msra.mxu0 %v107
  %283 = vmatprep.subr.bf16.mxu0 0
  %284 = vmatpush1.bf16.msra.mxu0 0
  %285 = vmatprep.subr.bf16.mxu0 0
  %286 = vmatpush1.bf16.msra.mxu0 0
  %287 = vmatprep.subr.bf16.mxu0 0
  %288 = vmatpush1.bf16.msra.mxu0 0
  %289 = vmatprep.subr.bf16.mxu0 0
  %290 = vmatpush1.bf16.msra.mxu0 0
  %291 = vmatprep.subr.bf16.mxu0 0
  %292 = vmatpush1.bf16.msra.mxu0 0
  %293 = vmatprep.subr.bf16.mxu0 0
  %294 = vmatpush1.bf16.msra.mxu0 0
  %295 = vmatprep.subr.bf16.mxu0 0
  %296 = vmatpush1.bf16.msra.mxu0 0
  %297 = vmatprep.subr.bf16.mxu0 0
  %298 = vmatpush1.bf16.msra.mxu0 0
  %299 = vmatprep.subr.bf16.mxu0 0
  %300 = vmatpush1.bf16.msra.mxu0 0
  %301 = vmatprep.subr.bf16.mxu0 0
  %302 = vmatpush1.bf16.msra.mxu0 0
  %303 = vmatprep.subr.bf16.mxu0 0
  %304 = vmatpush1.bf16.msra.mxu0 0
  %305 = vmatprep.subr.bf16.mxu0 0
  %306 = vmatpush1.bf16.msra.mxu0 0
  %307 = vmatprep.subr.bf16.mxu0 0
  %308 = vmatpush1.bf16.msra.mxu0 0
  %309 = vmatprep.subr.bf16.mxu0 0
  %310 = vmatpush1.bf16.msra.mxu0 0
  %311 = vmatprep.subr.bf16.mxu0 0
  %312 = vmatpush1.bf16.msra.mxu0 0
  %313 = vmatprep.mubr.bf16.mxu0 0
  %314 = vmatmul.mubr.bf16.gmra.mrb[0].mxu0 %v279
  %v315 = vpop.f32.mrb[0].mxu0
  %v316 = vadd.f32 0.0, %v315
  %v317 = vpop.f32.mrb[0].mxu0
  %v318 = vpop.f32.mrb[0].mxu0
  %v319 = vpop.f32.mrb[0].mxu0
  %320 = vdwg.mxu0
  %v321 = vadd.f32 %v277, %v316
  %v322 = vadd.f32 %v321, %v157
  %v323 = vmax.f32 %v322, 0.0
  %v324 = vpack.c.bf16 %v323, %v323
  %v326 = vsel %vm181, %v324, 0
  %328 = vmatprep.subr.bf16.mxu0 0
  %329 = vmatpush1.bf16.msra.mxu0 %v177
  %330 = vmatprep.subr.bf16.mxu0 0
  %331 = vmatpush1.bf16.msra.mxu0 %v178
  %332 = vmatprep.subr.bf16.mxu0 0
  %333 = vmatpush1.bf16.msra.mxu0 0
  %334 = vmatprep.subr.bf16.mxu0 0
  %335 = vmatpush1.bf16.msra.mxu0 0
  %336 = vmatprep.subr.bf16.mxu0 0
  %337 = vmatpush1.bf16.msra.mxu0 0
  %338 = vmatprep.subr.bf16.mxu0 0
  %339 = vmatpush1.bf16.msra.mxu0 0
  %340 = vmatprep.subr.bf16.mxu0 0
  %341 = vmatpush1.bf16.msra.mxu0 0
  %342 = vmatprep.subr.bf16.mxu0 0
  %343 = vmatpush1.bf16.msra.mxu0 0
  %344 = vmatprep.subr.bf16.mxu0 0
  %345 = vmatpush1.bf16.msra.mxu0 0
  %346 = vmatprep.subr.bf16.mxu0 0
  %347 = vmatpush1.bf16.msra.mxu0 0
  %348 = vmatprep.subr.bf16.mxu0 0
  %349 = vmatpush1.bf16.msra.mxu0 0
  %350 = vmatprep.subr.bf16.mxu0 0
  %351 = vmatpush1.bf16.msra.mxu0 0
  %352 = vmatprep.subr.bf16.mxu0 0
  %353 = vmatpush1.bf16.msra.mxu0 0
  %354 = vmatprep.subr.bf16.mxu0 0
  %355 = vmatpush1.bf16.msra.mxu0 0
  %356 = vmatprep.subr.bf16.mxu0 0
  %357 = vmatpush1.bf16.msra.mxu0 0
  %358 = vmatprep.subr.bf16.mxu0 0
  %359 = vmatpush1.bf16.msra.mxu0 0
  %360 = vmatprep.mubr.bf16.mxu0 0
  %361 = vmatmul.mubr.bf16.gmra.mrb[0].mxu0 %v326
  %v362 = vpop.f32.mrb[0].mxu0
  %v363 = vadd.f32 %v168, %v362
  %v364 = vpop.f32.mrb[0].mxu0
  %v365 = vpop.f32.mrb[0].mxu0
  %v366 = vpop.f32.mrb[0].mxu0
  %367 = vdwg.mxu0
  %v368 = vmax.f32 %v363, 0.0
  %v369 = vpack.c.bf16 %v368, %v368
  %371 = vrot.lane.b32.xlu0 %v369, 16
  %v372 = vpop.permute.xlu0 %371
  %v375 = vsel %vm109, %v226, %v372
  %v376 = vld [vmem:[%s4] sm:$0xf]
  %v377 = vld [vmem:[%s4 + $0x4] sm:$0xf]
  %v378 = vld [vmem:[%s4 + $0x8] sm:$0xf]
  %v379 = vld [vmem:[%s4 + $0xc] sm:$0xf]
  %v380 = vlaneseq
  %v381 = vshrl.u32 %v380, 7
  %v382 = vsub.s32 3, %v381
  %v383 = vrot.slane %v34, %v382
  %v388 = vunpack.c.l.b16 %v376
  %v389 = vunpack.c.l.b16 %v377
  %v390 = vunpack.c.l.b16 %v378
  %v391 = vunpack.c.l.b16 %v379
  %v392 = vpack.c.b16 %v389, %v388
  %v393 = vpack.c.b16 %v391, %v390
  %v396 = vsel %vm181, %v375, 0
  %398 = vmatprep.subr.bf16.mxu0 0
  %399 = vmatpush1.bf16.msra.mxu0 %v392
  %400 = vmatprep.subr.bf16.mxu0 0
  %401 = vmatpush1.bf16.msra.mxu0 %v393
  %402 = vmatprep.subr.bf16.mxu0 0
  %403 = vmatpush1.bf16.msra.mxu0 0
  %404 = vmatprep.subr.bf16.mxu0 0
  %405 = vmatpush1.bf16.msra.mxu0 0
  %406 = vmatprep.subr.bf16.mxu0 0
  %407 = vmatpush1.bf16.msra.mxu0 0
  %408 = vmatprep.subr.bf16.mxu0 0
  %409 = vmatpush1.bf16.msra.mxu0 0
  %410 = vmatprep.subr.bf16.mxu0 0
  %411 = vmatpush1.bf16.msra.mxu0 0
  %412 = vmatprep.subr.bf16.mxu0 0
  %413 = vmatpush1.bf16.msra.mxu0 0
  %414 = vmatprep.subr.bf16.mxu0 0
  %415 = vmatpush1.bf16.msra.mxu0 0
  %416 = vmatprep.subr.bf16.mxu0 0
  %417 = vmatpush1.bf16.msra.mxu0 0
  %418 = vmatprep.subr.bf16.mxu0 0
  %419 = vmatpush1.bf16.msra.mxu0 0
  %420 = vmatprep.subr.bf16.mxu0 0
  %421 = vmatpush1.bf16.msra.mxu0 0
  %422 = vmatprep.subr.bf16.mxu0 0
  %423 = vmatpush1.bf16.msra.mxu0 0
  %424 = vmatprep.subr.bf16.mxu0 0
  %425 = vmatpush1.bf16.msra.mxu0 0
  %426 = vmatprep.subr.bf16.mxu0 0
  %427 = vmatpush1.bf16.msra.mxu0 0
  %428 = vmatprep.subr.bf16.mxu0 0
  %429 = vmatpush1.bf16.msra.mxu0 0
  %430 = vmatprep.mubr.bf16.mxu0 0
  %431 = vmatmul.mubr.bf16.gmra.mrb[0].mxu0 %v396
  %v432 = vpop.f32.mrb[0].mxu0
  %v433 = vadd.f32 %v383, %v432
  %v434 = vpop.f32.mrb[0].mxu0
  %v435 = vpop.f32.mrb[0].mxu0
  %v436 = vpop.f32.mrb[0].mxu0
  %437 = vdwg.mxu0
  %v438 = vmax.f32 %v433, 0.0
  %v439 = vpack.c.bf16 %v438, %v438
  %v440 = vld [vmem:[%s5] sm:$0xf]
  %v441 = vld [vmem:[%s5 + $0x4] sm:$0xf]
  %v442 = vld [vmem:[%s5 + $0x8] sm:$0xf]
  %v443 = vld [vmem:[%s5 + $0xc] sm:$0xf]
  %v444 = vld [vmem:[%s5 + $0x10] sm:$0xf]
  %v445 = vld [vmem:[%s5 + $0x14] sm:$0xf]
  %v446 = vld [vmem:[%s5 + $0x18] sm:$0xf]
  %v447 = vld [vmem:[%s5 + $0x1c] sm:$0xf]
  %v448 = vld [vmem:[%s5 + $0x20] sm:$0xf]
  %v449 = vld [vmem:[%s5 + $0x24] sm:$0xf]
  %v450 = vld [vmem:[%s5 + $0x28] sm:$0xf]
  %v451 = vld [vmem:[%s5 + $0x2c] sm:$0xf]
  %v452 = vld [vmem:[%s5 + $0x30] sm:$0xf]
  %v453 = vld [vmem:[%s5 + $0x34] sm:$0xf]
  %v454 = vld [vmem:[%s5 + $0x38] sm:$0xf]
  %v455 = vld [vmem:[%s5 + $0x3c] sm:$0xf]
  %v456 = vlaneseq
  %v457 = vshrl.u32 %v456, 7
  %v458 = vsub.s32 4, %v457
  %v459 = vrot.slane %v34, %v458
  %v476 = vunpack.c.l.b16 %v440
  %v477 = vunpack.c.l.b16 %v441
  %v478 = vunpack.c.l.b16 %v442
  %v479 = vunpack.c.l.b16 %v443
  %v480 = vunpack.c.l.b16 %v444
  %v481 = vunpack.c.l.b16 %v445
  %v482 = vunpack.c.l.b16 %v446
  %v483 = vunpack.c.l.b16 %v447
  %v484 = vunpack.c.l.b16 %v448
  %v485 = vunpack.c.l.b16 %v449
  %v486 = vunpack.c.l.b16 %v450
  %v487 = vunpack.c.l.b16 %v451
  %v488 = vunpack.c.l.b16 %v452
  %v489 = vunpack.c.l.b16 %v453
  %v490 = vunpack.c.l.b16 %v454
  %v491 = vunpack.c.l.b16 %v455
  %v492 = vpack.c.b16 %v477, %v476
  %v493 = vpack.c.b16 %v479, %v478
  %v494 = vpack.c.b16 %v481, %v480
  %v495 = vpack.c.b16 %v483, %v482
  %v496 = vpack.c.b16 %v485, %v484
  %v497 = vpack.c.b16 %v487, %v486
  %v498 = vpack.c.b16 %v489, %v488
  %v499 = vpack.c.b16 %v491, %v490
  %508 = vmatprep.subr.bf16.mxu0 0
  %509 = vmatpush1.bf16.msra.mxu0 %v492
  %510 = vmatprep.subr.bf16.mxu0 0
  %511 = vmatpush1.bf16.msra.mxu0 %v493
  %512 = vmatprep.subr.bf16.mxu0 0
  %513 = vmatpush1.bf16.msra.mxu0 %v494
  %514 = vmatprep.subr.bf16.mxu0 0
  %515 = vmatpush1.bf16.msra.mxu0 %v495
  %516 = vmatprep.subr.bf16.mxu0 0
  %517 = vmatpush1.bf16.msra.mxu0 %v496
  %518 = vmatprep.subr.bf16.mxu0 0
  %519 = vmatpush1.bf16.msra.mxu0 %v497
  %520 = vmatprep.subr.bf16.mxu0 0
  %521 = vmatpush1.bf16.msra.mxu0 %v498
  %522 = vmatprep.subr.bf16.mxu0 0
  %523 = vmatpush1.bf16.msra.mxu0 %v499
  %524 = vmatprep.subr.bf16.mxu0 0
  %525 = vmatpush1.bf16.msra.mxu0 0
  %526 = vmatprep.subr.bf16.mxu0 0
  %527 = vmatpush1.bf16.msra.mxu0 0
  %528 = vmatprep.subr.bf16.mxu0 0
  %529 = vmatpush1.bf16.msra.mxu0 0
  %530 = vmatprep.subr.bf16.mxu0 0
  %531 = vmatpush1.bf16.msra.mxu0 0
  %532 = vmatprep.subr.bf16.mxu0 0
  %533 = vmatpush1.bf16.msra.mxu0 0
  %534 = vmatprep.subr.bf16.mxu0 0
  %535 = vmatpush1.bf16.msra.mxu0 0
  %536 = vmatprep.subr.bf16.mxu0 0
  %537 = vmatpush1.bf16.msra.mxu0 0
  %538 = vmatprep.subr.bf16.mxu0 0
  %539 = vmatpush1.bf16.msra.mxu0 0
  %540 = vmatprep.mubr.bf16.mxu0 0
  %541 = vmatmul.mubr.bf16.gmra.mrb[0].mxu0 %v439
  %v542 = vpop.f32.mrb[0].mxu0
  %v543 = vadd.f32 %v459, %v542
  %v544 = vpop.f32.mrb[0].mxu0
  %v545 = vpop.f32.mrb[0].mxu0
  %v546 = vpop.f32.mrb[0].mxu0
  %547 = vdwg.mxu0
  %v548 = vmax.f32 %v543, 0.0
  %v549 = vpack.c.bf16 %v548, %v548
  %v550 = vld [vmem:[%s6] sm:$0xf]
  %v551 = vld [vmem:[%s6 + $0x4] sm:$0xf]
  %v552 = vld [vmem:[%s6 + $0x8] sm:$0xf]
  %v553 = vld [vmem:[%s6 + $0xc] sm:$0xf]
  %v554 = vld [vmem:[%s6 + $0x10] sm:$0xf]
  %v555 = vld [vmem:[%s6 + $0x14] sm:$0xf]
  %v556 = vld [vmem:[%s6 + $0x18] sm:$0xf]
  %v557 = vld [vmem:[%s6 + $0x1c] sm:$0xf]
  %v558 = vlaneseq
  %v559 = vshrl.u32 %v558, 7
  %v560 = vsub.s32 5, %v559
  %v561 = vrot.slane %v34, %v560
  %v570 = vunpack.c.l.b16 %v550
  %v571 = vunpack.c.l.b16 %v551
  %v572 = vunpack.c.l.b16 %v552
  %v573 = vunpack.c.l.b16 %v553
  %v574 = vunpack.c.l.b16 %v554
  %v575 = vunpack.c.l.b16 %v555
  %v576 = vunpack.c.l.b16 %v556
  %v577 = vunpack.c.l.b16 %v557
  %v578 = vpack.c.b16 %v571, %v570
  %v579 = vpack.c.b16 %v573, %v572
  %v580 = vpack.c.b16 %v575, %v574
  %v581 = vpack.c.b16 %v577, %v576
  %vm586 = vcmask 523264
  %v588 = vsel %vm586, %v549, 0
  %590 = vmatprep.subr.bf16.mxu0 0
  %591 = vmatpush1.bf16.msra.mxu0 %v578
  %592 = vmatprep.subr.bf16.mxu0 0
  %593 = vmatpush1.bf16.msra.mxu0 %v579
  %594 = vmatprep.subr.bf16.mxu0 0
  %595 = vmatpush1.bf16.msra.mxu0 %v580
  %596 = vmatprep.subr.bf16.mxu0 0
  %597 = vmatpush1.bf16.msra.mxu0 %v581
  %598 = vmatprep.subr.bf16.mxu0 0
  %599 = vmatpush1.bf16.msra.mxu0 0
  %600 = vmatprep.subr.bf16.mxu0 0
  %601 = vmatpush1.bf16.msra.mxu0 0
  %602 = vmatprep.subr.bf16.mxu0 0
  %603 = vmatpush1.bf16.msra.mxu0 0
  %604 = vmatprep.subr.bf16.mxu0 0
  %605 = vmatpush1.bf16.msra.mxu0 0
  %606 = vmatprep.subr.bf16.mxu0 0
  %607 = vmatpush1.bf16.msra.mxu0 0
  %608 = vmatprep.subr.bf16.mxu0 0
  %609 = vmatpush1.bf16.msra.mxu0 0
  %610 = vmatprep.subr.bf16.mxu0 0
  %611 = vmatpush1.bf16.msra.mxu0 0
  %612 = vmatprep.subr.bf16.mxu0 0
  %613 = vmatpush1.bf16.msra.mxu0 0
  %614 = vmatprep.subr.bf16.mxu0 0
  %615 = vmatpush1.bf16.msra.mxu0 0
  %616 = vmatprep.subr.bf16.mxu0 0
  %617 = vmatpush1.bf16.msra.mxu0 0
  %618 = vmatprep.subr.bf16.mxu0 0
  %619 = vmatpush1.bf16.msra.mxu0 0
  %620 = vmatprep.subr.bf16.mxu0 0
  %621 = vmatpush1.bf16.msra.mxu0 0
  %622 = vmatprep.mubr.bf16.mxu0 0
  %623 = vmatmul.mubr.bf16.gmra.mrb[0].mxu0 %v588
  %v624 = vpop.f32.mrb[0].mxu0
  %v625 = vadd.f32 %v561, %v624
  %v626 = vpop.f32.mrb[0].mxu0
  %v627 = vpop.f32.mrb[0].mxu0
  %v628 = vpop.f32.mrb[0].mxu0
  %629 = vdwg.mxu0
  %v630 = vmax.f32 %v625, 0.0
  %v631 = vpack.c.bf16 %v630, %v630
  %v632 = vld [vmem:[%s7] sm:$0xf]
  %v633 = vld [vmem:[%s7 + $0x4] sm:$0xf]
  %v634 = vld [vmem:[%s7 + $0x8] sm:$0xf]
  %v635 = vld [vmem:[%s7 + $0xc] sm:$0xf]
  %v636 = vlaneseq
  %v637 = vshrl.u32 %v636, 7
  %v638 = vsub.s32 6, %v637
  %v639 = vrot.slane %v34, %v638
  %v644 = vunpack.c.l.b16 %v632
  %v645 = vunpack.c.l.b16 %v633
  %v646 = vunpack.c.l.b16 %v634
  %v647 = vunpack.c.l.b16 %v635
  %v648 = vpack.c.b16 %v645, %v644
  %v649 = vpack.c.b16 %v647, %v646
  %v653 = vsel %vm181, %v631, 0
  %655 = vmatprep.subr.bf16.mxu0 0
  %656 = vmatpush1.bf16.msra.mxu0 %v648
  %657 = vmatprep.subr.bf16.mxu0 0
  %658 = vmatpush1.bf16.msra.mxu0 %v649
  %659 = vmatprep.subr.bf16.mxu0 0
  %660 = vmatpush1.bf16.msra.mxu0 0
  %661 = vmatprep.subr.bf16.mxu0 0
  %662 = vmatpush1.bf16.msra.mxu0 0
  %663 = vmatprep.subr.bf16.mxu0 0
  %664 = vmatpush1.bf16.msra.mxu0 0
  %665 = vmatprep.subr.bf16.mxu0 0
  %666 = vmatpush1.bf16.msra.mxu0 0
  %667 = vmatprep.subr.bf16.mxu0 0
  %668 = vmatpush1.bf16.msra.mxu0 0
  %669 = vmatprep.subr.bf16.mxu0 0
  %670 = vmatpush1.bf16.msra.mxu0 0
  %671 = vmatprep.subr.bf16.mxu0 0
  %672 = vmatpush1.bf16.msra.mxu0 0
  %673 = vmatprep.subr.bf16.mxu0 0
  %674 = vmatpush1.bf16.msra.mxu0 0
  %675 = vmatprep.subr.bf16.mxu0 0
  %676 = vmatpush1.bf16.msra.mxu0 0
  %677 = vmatprep.subr.bf16.mxu0 0
  %678 = vmatpush1.bf16.msra.mxu0 0
  %679 = vmatprep.subr.bf16.mxu0 0
  %680 = vmatpush1.bf16.msra.mxu0 0
  %681 = vmatprep.subr.bf16.mxu0 0
  %682 = vmatpush1.bf16.msra.mxu0 0
  %683 = vmatprep.subr.bf16.mxu0 0
  %684 = vmatpush1.bf16.msra.mxu0 0
  %685 = vmatprep.subr.bf16.mxu0 0
  %686 = vmatpush1.bf16.msra.mxu0 0
  %687 = vmatprep.mubr.bf16.mxu0 0
  %688 = vmatmul.mubr.bf16.gmra.mrb[0].mxu0 %v653
  %v689 = vpop.f32.mrb[0].mxu0
  %v690 = vadd.f32 %v639, %v689
  %v691 = vpop.f32.mrb[0].mxu0
  %v692 = vpop.f32.mrb[0].mxu0
  %v693 = vpop.f32.mrb[0].mxu0
  %694 = vdwg.mxu0
  %v695 = vpack.c.bf16 %v690, %v690
  %696 = vst [vmem:[%s9] sm:$0xf] %v695
  // Predicated region
  $region38: #{forward.3} parent=0 // pred_check
    _
  $region39: #{forward.3} parent=0 // pred_check_branch
    %698 = sbr.rel (0) target = $region41
  $region40: #{forward.3} parent=0 // pred_region
    _
  $region41: #{forward.3} parent=0 // pred_fallthru
    _
  // Predicated region
  $region42: #{forward.3} parent=0 // pred_check
    _
  $region43: #{forward.3} parent=0 // pred_check_branch
    %700 = sbr.rel (0) target = $region45
  $region44: #{forward.3} parent=0 // pred_region
    _
  $region45: #{forward.3} parent=0 // pred_fallthru
    _

</llo_original>
